<compile_context>
chip_gen: v7x
topology: tpu7x:2x2x1
jax: 0.10.0
libtpu: 0.0.40
codegen_flags: <defaults>
</compile_context>

<pallas_src>
import jax
import jax.numpy as jnp
from jax import lax
from jax.experimental import pallas as pl
from jax.experimental.pallas import tpu as pltpu


def residual_conv_block_kernel(x_ref, w3_ref, w1_ref, b3_ref, b1_ref, out_ref):
    # x_ref  : (1, TH+2, W+2, Cin)  bf16 padded / halo'd activation tile
    # w3_ref : (9*Cin, Cp)          bf16 BN-folded 3x3 weights (im2col layout)
    # w1_ref : (Cin, Cp)            bf16 BN-folded 1x1 weights
    # b3/b1  : (1, Cp)              f32  BN-folded biases
    # out_ref: (1, TH, W, Cp)       f32
    _, TH, W, Cp = out_ref.shape
    Cin = x_ref.shape[3]

    # im2col: 9 shifted taps sliced straight from the ref (keeps live ranges
    # small), concatenated into one (TH*W, 9*Cin) operand for a single MXU pass.
    cols = []
    for kh in range(3):
        for kw in range(3):
            cols.append(x_ref[0, kh:kh + TH, kw:kw + W, :].reshape(TH * W, Cin))
    patch = jnp.concatenate(cols, axis=-1)                      # (TH*W, 9*Cin) bf16

    # Main branch: single bf16 matmul, K = 9*Cin, N = Cp (lane-dense), f32 acc.
    acc3 = jnp.dot(patch, w3_ref[...], preferred_element_type=jnp.float32)
    y = jnp.maximum(acc3 + b3_ref[...], 0.0)                    # folded bias + ReLU

    # Residual branch: 1x1 conv on the centre tap (kh = kw = 1), no ReLU.
    acc1 = jnp.dot(cols[4], w1_ref[...], preferred_element_type=jnp.float32)
    y = y + acc1 + b1_ref[...]

    out_ref[0] = y.reshape(TH, W, Cp).astype(out_ref.dtype)


def residual_conv_block(x_nchw, params, h_tile=None):
    """x_nchw: (N, Cin, H, W) float32. Returns (N, Cout, H, W) float32."""
    N, Cin, H, W = x_nchw.shape
    Cout = params["w3"].shape[3]
    Cp = ((Cout + 127) // 128) * 128            # lane-dense output channels

    # Spatial H-tiling (with a 2-row halo) -> bounded VMEM per step and a
    # (N, HT) parallel grid.
    if h_tile is None:
        h_tile = max(1, min(H, 1024 // max(W, 1)))   # ~<=1024 im2col rows / step
    TH = max(1, min(h_tile, H))
    while H % TH:
        TH -= 1
    HT = H // TH

    # NCHW -> NHWC, cast activations to bf16 (halves DMA bytes), pad=1 halo,
    # build overlapping H-tiles.
    x_nhwc = jnp.transpose(x_nchw, (0, 2, 3, 1)).astype(jnp.bfloat16)
    x_pad = jnp.pad(x_nhwc, ((0, 0), (1, 1), (1, 1), (0, 0)))
    x_tiles = jnp.concatenate(
        [x_pad[:, t * TH:t * TH + TH + 2][:, None] for t in range(HT)], axis=1
    ).reshape(N * HT, TH + 2, W + 2, Cin)

    # BN already folded into w/b (eval mode). Pad Cout -> Cp, cast weights bf16.
    pad_c = ((0, 0), (0, Cp - Cout))
    w3 = jnp.pad(params["w3"].reshape(9 * Cin, Cout), pad_c).astype(jnp.bfloat16)
    w1 = jnp.pad(params["w1"], pad_c).astype(jnp.bfloat16)
    b3 = jnp.pad(params["b3"].reshape(1, Cout), pad_c)
    b1 = jnp.pad(params["b1"].reshape(1, Cout), pad_c)

    def const(shape):
        # constant index_map -> block stays resident, no re-DMA across steps
        return pl.BlockSpec(shape, lambda n, h: (0,) * len(shape))

    out = pl.pallas_call(
        residual_conv_block_kernel,
        out_shape=jax.ShapeDtypeStruct((N, H, W, Cp), jnp.float32),
        grid_spec=pltpu.PrefetchScalarGridSpec(
            num_scalar_prefetch=0,
            grid=(N, HT),
            in_specs=[
                pl.BlockSpec((1, TH + 2, W + 2, Cin),
                             lambda n, h: (n * HT + h, 0, 0, 0)),
                const((9 * Cin, Cp)),
                const((Cin, Cp)),
                const((1, Cp)),
                const((1, Cp)),
            ],
            out_specs=pl.BlockSpec((1, TH, W, Cp), lambda n, h: (n, h, 0, 0)),
        ),
        compiler_params=pltpu.CompilerParams(
            dimension_semantics=("parallel", "parallel"),
            vmem_limit_bytes=32 * 1024 * 1024),
    )(x_tiles, w3, w1, b3, b1)

    # slice channel padding off, back to NCHW
    return jnp.transpose(out[..., :Cout], (0, 3, 1, 2))


def make_params(key, cin, cout, eps=1e-5):
    """Deterministic conv + BN parameters; eval-mode BN folded into w/b."""
    ks = jax.random.split(key, 10)
    w3_oihw = jax.random.normal(ks[0], (cout, cin, 3, 3), jnp.float32) * 0.1
    b3 = jax.random.normal(ks[1], (cout,), jnp.float32) * 0.1
    w1_oihw = jax.random.normal(ks[2], (cout, cin, 1, 1), jnp.float32) * 0.1
    b1 = jax.random.normal(ks[3], (cout,), jnp.float32) * 0.1
    g3 = 1.0 + 0.1 * jax.random.normal(ks[4], (cout,), jnp.float32)
    beta3 = 0.1 * jax.random.normal(ks[5], (cout,), jnp.float32)
    m3 = 0.1 * jax.random.normal(ks[6], (cout,), jnp.float32)
    v3 = jnp.abs(1.0 + 0.1 * jax.random.normal(ks[7], (cout,), jnp.float32))
    g1 = 1.0 + 0.1 * jax.random.normal(ks[8], (cout,), jnp.float32)
    beta1 = 0.1 * jax.random.normal(ks[9], (cout,), jnp.float32)
    m1 = jnp.zeros((cout,), jnp.float32)
    v1 = jnp.ones((cout,), jnp.float32)

    s3 = g3 / jnp.sqrt(v3 + eps)
    o3 = beta3 - m3 * s3
    s1 = g1 / jnp.sqrt(v1 + eps)
    o1 = beta1 - m1 * s1

    # Fold eval-mode BN into the conv (exact, BN is affine):
    #   (conv(x, w) + b) * s + o  ==  conv(x, w*s) + (b*s + o)
    w3_hwio = jnp.transpose(w3_oihw, (2, 3, 1, 0))            # (3,3,Cin,Cout)
    w1_io = jnp.transpose(w1_oihw[:, :, 0, 0], (1, 0))        # (Cin,Cout)
    params = {
        "w3": w3_hwio * s3[None, None, None, :],
        "b3": b3 * s3 + o3,
        "w1": w1_io * s1[None, :],
        "b1": b1 * s1 + o1,
    }
    torch_style = {"w3_oihw": w3_oihw, "b3": b3, "w1_oihw": w1_oihw, "b1": b1,
                   "s3": s3, "o3": o3, "s1": s1, "o1": o1}
    return params, torch_style


def reference_forward(x_nchw, tp):
    """Pure-JAX f32 reference matching the PyTorch forward (eval-mode BN)."""
    dn = ("NCHW", "OIHW", "NCHW")
    hp = lax.Precision.HIGHEST
    y3 = lax.conv_general_dilated(x_nchw, tp["w3_oihw"], (1, 1), ((1, 1), (1, 1)),
                                  dimension_numbers=dn, precision=hp)
    y3 = (y3 + tp["b3"].reshape(1, -1, 1, 1)) * tp["s3"].reshape(1, -1, 1, 1) \
        + tp["o3"].reshape(1, -1, 1, 1)
    y3 = jnp.maximum(y3, 0.0)
    y1 = lax.conv_general_dilated(x_nchw, tp["w1_oihw"], (1, 1), ((0, 0), (0, 0)),
                                  dimension_numbers=dn, precision=hp)
    y1 = (y1 + tp["b1"].reshape(1, -1, 1, 1)) * tp["s1"].reshape(1, -1, 1, 1) \
        + tp["o1"].reshape(1, -1, 1, 1)
    return y3 + y1


def reference_forward_folded_bf16(x_nchw, params):
    """Reference applying the kernel's exact bf16 input/weight quantization."""
    x = x_nchw.astype(jnp.bfloat16).astype(jnp.float32)
    w3 = params["w3"].astype(jnp.bfloat16).astype(jnp.float32)        # (3,3,Ci,Co)
    w1 = params["w1"].astype(jnp.bfloat16).astype(jnp.float32)[None, None]
    dn = ("NCHW", "HWIO", "NCHW")
    hp = lax.Precision.HIGHEST
    y3 = lax.conv_general_dilated(x, w3, (1, 1), ((1, 1), (1, 1)),
                                  dimension_numbers=dn, precision=hp)
    y3 = jnp.maximum(y3 + params["b3"].reshape(1, -1, 1, 1), 0.0)
    y1 = lax.conv_general_dilated(x, w1, (1, 1), ((0, 0), (0, 0)),
                                  dimension_numbers=dn, precision=hp)
    return y3 + y1 + params["b1"].reshape(1, -1, 1, 1)


if __name__ == "__main__":
    N, Cin, Cout, H, W = 2, 4, 8, 16, 16
    key = jax.random.PRNGKey(0)
    kx, kp = jax.random.split(key)
    x = jax.random.normal(kx, (N, Cin, H, W), jnp.float32)

    params, torch_style = make_params(kp, Cin, Cout)

    # H-tiled path (grid = (N, 2), exercises the halo logic) ...
    out_tiled = jax.block_until_ready(residual_conv_block(x, params, h_tile=8))
    # ... and the default one-tile-per-image path (grid = (N, 1)).
    out_full = jax.block_until_ready(residual_conv_block(x, params))

    ref_q = jax.block_until_ready(reference_forward_folded_bf16(x, params))
    ref_f32 = jax.block_until_ready(reference_forward(x, torch_style))

    for out in (out_tiled, out_full):
        assert out.shape == (N, Cout, H, W)
        # tight check vs a reference with identical bf16 operand quantization
        assert jnp.allclose(out, ref_q, atol=1e-4, rtol=1e-4), \
            f"max abs err vs bf16-quantized ref = {jnp.max(jnp.abs(out - ref_q))}"
        # sanity check vs the full-precision original (unfolded BN) semantics
        assert jnp.allclose(out, ref_f32, atol=5e-2, rtol=5e-2), \
            f"max abs err vs f32 ref = {jnp.max(jnp.abs(out - ref_f32))}"

    print("KERNEL_OK")
</pallas_src>

<mosaic_0001>
module attributes {stable_mosaic.version = 11 : i64} {
  func.func @residual_conv_block_kernel(%arg0: i32, %arg1: i32, %arg2: memref<1x10x18x4xbf16, #tpu.memory_space<vmem>>, %arg3: memref<36x128xbf16, #tpu.memory_space<vmem>>, %arg4: memref<4x128xbf16, #tpu.memory_space<vmem>>, %arg5: memref<1x128xf32, #tpu.memory_space<vmem>>, %arg6: memref<1x128xf32, #tpu.memory_space<vmem>>, %arg7: memref<1x8x16x128xf32, #tpu.memory_space<vmem>>) attributes {dimension_semantics = [#tpu.dimension_semantics<parallel>, #tpu.dimension_semantics<parallel>], iteration_bounds = array<i64: 2, 2>, scalar_prefetch = 0 : i64, scratch_operands = 0 : i64, tpu.core_type = #tpu.core_type<tc>, window_params = [{transform_indices = @transform_0, window_bounds = array<i64: 1, 10, 18, 4>}, {pipeline_mode = #tpu.pipeline_mode<synchronous>, transform_indices = @transform_1, window_bounds = array<i64: 36, 128>}, {pipeline_mode = #tpu.pipeline_mode<synchronous>, transform_indices = @transform_2, window_bounds = array<i64: 4, 128>}, {pipeline_mode = #tpu.pipeline_mode<synchronous>, transform_indices = @transform_3, window_bounds = array<i64: 1, 128>}, {pipeline_mode = #tpu.pipeline_mode<synchronous>, transform_indices = @transform_4, window_bounds = array<i64: 1, 128>}, {transform_indices = @transform_5, window_bounds = array<i64: 1, 8, 16, 128>}]} {
    %c0 = arith.constant 0 : index
    %c0_0 = arith.constant 0 : index
    %c0_1 = arith.constant 0 : index
    %c0_2 = arith.constant 0 : index
    %0 = vector.load %arg2[%c0, %c0_0, %c0_1, %c0_2] : memref<1x10x18x4xbf16, #tpu.memory_space<vmem>>, vector<1x8x16x4xbf16>
    %1 = vector.shape_cast %0 : vector<1x8x16x4xbf16> to vector<8x16x4xbf16>
    %2 = vector.shape_cast %1 : vector<8x16x4xbf16> to vector<128x4xbf16>
    %c0_3 = arith.constant 0 : index
    %c0_4 = arith.constant 0 : index
    %c1 = arith.constant 1 : index
    %c0_5 = arith.constant 0 : index
    %3 = vector.load %arg2[%c0_3, %c0_4, %c1, %c0_5] : memref<1x10x18x4xbf16, #tpu.memory_space<vmem>>, vector<1x8x16x4xbf16>
    %4 = vector.shape_cast %3 : vector<1x8x16x4xbf16> to vector<8x16x4xbf16>
    %5 = vector.shape_cast %4 : vector<8x16x4xbf16> to vector<128x4xbf16>
    %c0_6 = arith.constant 0 : index
    %c0_7 = arith.constant 0 : index
    %c2 = arith.constant 2 : index
    %c0_8 = arith.constant 0 : index
    %6 = vector.load %arg2[%c0_6, %c0_7, %c2, %c0_8] : memref<1x10x18x4xbf16, #tpu.memory_space<vmem>>, vector<1x8x16x4xbf16>
    %7 = vector.shape_cast %6 : vector<1x8x16x4xbf16> to vector<8x16x4xbf16>
    %8 = vector.shape_cast %7 : vector<8x16x4xbf16> to vector<128x4xbf16>
    %c0_9 = arith.constant 0 : index
    %c1_10 = arith.constant 1 : index
    %c0_11 = arith.constant 0 : index
    %c0_12 = arith.constant 0 : index
    %9 = vector.load %arg2[%c0_9, %c1_10, %c0_11, %c0_12] : memref<1x10x18x4xbf16, #tpu.memory_space<vmem>>, vector<1x8x16x4xbf16>
    %10 = vector.shape_cast %9 : vector<1x8x16x4xbf16> to vector<8x16x4xbf16>
    %11 = vector.shape_cast %10 : vector<8x16x4xbf16> to vector<128x4xbf16>
    %c0_13 = arith.constant 0 : index
    %c1_14 = arith.constant 1 : index
    %c1_15 = arith.constant 1 : index
    %c0_16 = arith.constant 0 : index
    %12 = vector.load %arg2[%c0_13, %c1_14, %c1_15, %c0_16] : memref<1x10x18x4xbf16, #tpu.memory_space<vmem>>, vector<1x8x16x4xbf16>
    %13 = vector.shape_cast %12 : vector<1x8x16x4xbf16> to vector<8x16x4xbf16>
    %14 = vector.shape_cast %13 : vector<8x16x4xbf16> to vector<128x4xbf16>
    %c0_17 = arith.constant 0 : index
    %c1_18 = arith.constant 1 : index
    %c2_19 = arith.constant 2 : index
    %c0_20 = arith.constant 0 : index
    %15 = vector.load %arg2[%c0_17, %c1_18, %c2_19, %c0_20] : memref<1x10x18x4xbf16, #tpu.memory_space<vmem>>, vector<1x8x16x4xbf16>
    %16 = vector.shape_cast %15 : vector<1x8x16x4xbf16> to vector<8x16x4xbf16>
    %17 = vector.shape_cast %16 : vector<8x16x4xbf16> to vector<128x4xbf16>
    %c0_21 = arith.constant 0 : index
    %c2_22 = arith.constant 2 : index
    %c0_23 = arith.constant 0 : index
    %c0_24 = arith.constant 0 : index
    %18 = vector.load %arg2[%c0_21, %c2_22, %c0_23, %c0_24] : memref<1x10x18x4xbf16, #tpu.memory_space<vmem>>, vector<1x8x16x4xbf16>
    %19 = vector.shape_cast %18 : vector<1x8x16x4xbf16> to vector<8x16x4xbf16>
    %20 = vector.shape_cast %19 : vector<8x16x4xbf16> to vector<128x4xbf16>
    %c0_25 = arith.constant 0 : index
    %c2_26 = arith.constant 2 : index
    %c1_27 = arith.constant 1 : index
    %c0_28 = arith.constant 0 : index
    %21 = vector.load %arg2[%c0_25, %c2_26, %c1_27, %c0_28] : memref<1x10x18x4xbf16, #tpu.memory_space<vmem>>, vector<1x8x16x4xbf16>
    %22 = vector.shape_cast %21 : vector<1x8x16x4xbf16> to vector<8x16x4xbf16>
    %23 = vector.shape_cast %22 : vector<8x16x4xbf16> to vector<128x4xbf16>
    %c0_29 = arith.constant 0 : index
    %c2_30 = arith.constant 2 : index
    %c2_31 = arith.constant 2 : index
    %c0_32 = arith.constant 0 : index
    %24 = vector.load %arg2[%c0_29, %c2_30, %c2_31, %c0_32] : memref<1x10x18x4xbf16, #tpu.memory_space<vmem>>, vector<1x8x16x4xbf16>
    %25 = vector.shape_cast %24 : vector<1x8x16x4xbf16> to vector<8x16x4xbf16>
    %26 = vector.shape_cast %25 : vector<8x16x4xbf16> to vector<128x4xbf16>
    %27 = tpu.concatenate %2, %5, %8, %11, %14, %17, %20, %23, %26 in 1 : vector<128x4xbf16>, vector<128x4xbf16>, vector<128x4xbf16>, vector<128x4xbf16>, vector<128x4xbf16>, vector<128x4xbf16>, vector<128x4xbf16>, vector<128x4xbf16>, vector<128x4xbf16> -> vector<128x36xbf16>
    %c0_33 = arith.constant 0 : index
    %c0_34 = arith.constant 0 : index
    %28 = vector.load %arg3[%c0_33, %c0_34] : memref<36x128xbf16, #tpu.memory_space<vmem>>, vector<36x128xbf16>
    %cst = arith.constant dense<0.000000e+00> : vector<128x128xf32>
    %29 = tpu.matmul %27, %28, %cst {dimension_numbers = #tpu.dot_dimension_numbers<[1], [0], [0], [1], [0, 0, 1, 1], [], []>} : vector<128x36xbf16>, vector<36x128xbf16>, vector<128x128xf32> -> vector<128x128xf32>
    %c0_35 = arith.constant 0 : index
    %c0_36 = arith.constant 0 : index
    %30 = vector.load %arg5[%c0_35, %c0_36] : memref<1x128xf32, #tpu.memory_space<vmem>>, vector<1x128xf32>
    %31 = vector.broadcast %30 : vector<1x128xf32> to vector<128x128xf32>
    %32 = arith.addf %29, %31 : vector<128x128xf32>
    %cst_37 = arith.constant 0.000000e+00 : f32
    %33 = vector.broadcast %cst_37 : f32 to vector<128x128xf32>
    %34 = arith.maximumf %32, %33 : vector<128x128xf32>
    %c0_38 = arith.constant 0 : index
    %c0_39 = arith.constant 0 : index
    %35 = vector.load %arg4[%c0_38, %c0_39] : memref<4x128xbf16, #tpu.memory_space<vmem>>, vector<4x128xbf16>
    %cst_40 = arith.constant dense<0.000000e+00> : vector<128x128xf32>
    %36 = tpu.matmul %14, %35, %cst_40 {dimension_numbers = #tpu.dot_dimension_numbers<[1], [0], [0], [1], [0, 0, 1, 1], [], []>} : vector<128x4xbf16>, vector<4x128xbf16>, vector<128x128xf32> -> vector<128x128xf32>
    %37 = arith.addf %34, %36 : vector<128x128xf32>
    %c0_41 = arith.constant 0 : index
    %c0_42 = arith.constant 0 : index
    %38 = vector.load %arg6[%c0_41, %c0_42] : memref<1x128xf32, #tpu.memory_space<vmem>>, vector<1x128xf32>
    %39 = vector.broadcast %38 : vector<1x128xf32> to vector<128x128xf32>
    %40 = arith.addf %37, %39 : vector<128x128xf32>
    %41 = vector.shape_cast %40 : vector<128x128xf32> to vector<8x16x128xf32>
    %c0_43 = arith.constant 0 : index
    %c0_44 = arith.constant 0 : index
    %c0_45 = arith.constant 0 : index
    %c0_46 = arith.constant 0 : index
    %42 = vector.load %arg7[%c0_43, %c0_44, %c0_45, %c0_46] : memref<1x8x16x128xf32, #tpu.memory_space<vmem>>, vector<1x8x16x128xf32>
    %43 = vector.shape_cast %42 : vector<1x8x16x128xf32> to vector<8x16x128xf32>
    %44 = vector.shape_cast %41 : vector<8x16x128xf32> to vector<1x8x16x128xf32>
    tpu.vector_store %arg7[%c0_43, %c0_44, %c0_45, %c0_46], %44 {strides = array<i32>} : memref<1x8x16x128xf32, #tpu.memory_space<vmem>>, vector<1x8x16x128xf32>,
    return
  }
  func.func @transform_0(%arg0: i32, %arg1: i32) -> (i32, i32, i32, i32) {
    %c2_i32 = arith.constant 2 : i32
    %0 = arith.muli %arg0, %c2_i32 : i32
    %1 = arith.addi %0, %arg1 : i32
    %c0_i32 = arith.constant 0 : i32
    %c0_i32_0 = arith.constant 0 : i32
    %c0_i32_1 = arith.constant 0 : i32
    %c0_i32_2 = arith.constant 0 : i32
    return %1, %c0_i32, %c0_i32_0, %c0_i32_1 : i32, i32, i32, i32
  }
  func.func @transform_1(%arg0: i32, %arg1: i32) -> (i32, i32) {
    %c0_i32 = arith.constant 0 : i32
    %c0_i32_0 = arith.constant 0 : i32
    %c0_i32_1 = arith.constant 0 : i32
    return %c0_i32, %c0_i32_0 : i32, i32
  }
  func.func @transform_2(%arg0: i32, %arg1: i32) -> (i32, i32) {
    %c0_i32 = arith.constant 0 : i32
    %c0_i32_0 = arith.constant 0 : i32
    %c0_i32_1 = arith.constant 0 : i32
    return %c0_i32, %c0_i32_0 : i32, i32
  }
  func.func @transform_3(%arg0: i32, %arg1: i32) -> (i32, i32) {
    %c0_i32 = arith.constant 0 : i32
    %c0_i32_0 = arith.constant 0 : i32
    %c0_i32_1 = arith.constant 0 : i32
    return %c0_i32, %c0_i32_0 : i32, i32
  }
  func.func @transform_4(%arg0: i32, %arg1: i32) -> (i32, i32) {
    %c0_i32 = arith.constant 0 : i32
    %c0_i32_0 = arith.constant 0 : i32
    %c0_i32_1 = arith.constant 0 : i32
    return %c0_i32, %c0_i32_0 : i32, i32
  }
  func.func @transform_5(%arg0: i32, %arg1: i32) -> (i32, i32, i32, i32) {
    %c0_i32 = arith.constant 0 : i32
    %c0_i32_0 = arith.constant 0 : i32
    %c0_i32_1 = arith.constant 0 : i32
    return %arg0, %arg1, %c0_i32, %c0_i32_0 : i32, i32, i32, i32
  }
}

</mosaic_0001>

<llo_original>
// kernel: tpu_custom_call.1
$region0: #{tpu_custom_call.1}
  #allocation0 [shape = 'u32[]', space=smem, size = 0x4, offset = 0x4, fixed_abs, tag = 'smem constant byte address 0x4 - core index']
  #allocation1 [shape = 'u32[144,128]{1,0:T(1,128)}', space=vmem, size = 0x12000, scoped, tag = 'internal scratch']
  %s0 = inlined_call_operand.vmem [shape: bf16[4,10,18,4], index: 0, kind: input, shape index: {}]
  %s1 = inlined_call_operand.vmem [shape: bf16[36,128], index: 1, kind: input, shape index: {}]
  %s2 = inlined_call_operand.vmem [shape: bf16[4,128], index: 2, kind: input, shape index: {}]
  %s3 = inlined_call_operand.vmem [shape: f32[1,128], index: 3, kind: input, shape index: {}]
  %s4 = inlined_call_operand.vmem [shape: f32[1,128], index: 4, kind: input, shape index: {}]
  %s5 = inlined_call_operand.hbm [shape: f32[2,16,16,128], index: 5, kind: output, shape index: {}]
  %s6 = sld [smem:[#allocation0]]
  $region53: #{tpu_custom_call.1} parent=0
    _
  %s8 = ssub.s32 1, %s6
  %s9 = scalar_select 0, %s8, %s6
  $region1: #{tpu_custom_call.1} parent=0
    #allocation2 [shape = 'u8[131072]{0}', space=vmem, size = 0x20000, scoped, tag = 'output window, operand 0']
    #allocation3 [shape = 's32[2]{0}', space=sflag, size = 0x8, scoped, tag = 'scoped memory for tpu_custom_call.1']
    %10 = vsyncpa [#allocation3], 0
    %s11 = scalar_lea.sflag [#allocation3], 1
    %12 = vsyncpa %s11, 0
    loop: start=0, step=1, limit=6
    $region2: #{tpu_custom_call.1} parent=1 // loop_pre_header
      _
    $region3: #{tpu_custom_call.1} parent=1 // loop_header
      %s14 = sphi 0, %s18
      %p15 = scmp.ge.s32.totalorder %s14, 6
      %s21 = sphi 0, %s33
      %s22 = sphi 0, %s29
      %s23 = sphi 0, %s21
      %s24 = sphi 0, %s22
      %s25 = sphi 0, %s23
      %s26 = sphi 0, %s24
      %s40 = sphi 0, %s42
      %s43 = sphi 0, %s40
      %s44 = sphi 0, %s43
      %s60 = sphi 0, %s44
      %s64 = sphi 0, %s64
      %s66 = sphi 0, %s64
      %s67 = sphi 0, %s66
      %s81 = sphi 0, %s67
      %s85 = sphi 0, %s85
      %s87 = sphi 0, %s85
      %s88 = sphi 0, %s87
      %s102 = sphi 0, %s88
      %s106 = sphi 0, %s106
      %s108 = sphi 0, %s106
      %s109 = sphi 0, %s108
      %s123 = sphi 0, %s109
      %s127 = sphi 0, %s127
      %s129 = sphi 0, %s127
      %s130 = sphi 0, %s129
      %s144 = sphi 0, %s130
      %s152 = sphi 0, %s154
      %s155 = sphi 0, %s152
      %s156 = sphi 0, %s155
      %s172 = sphi 0, %s156
    $region4: #{tpu_custom_call.1} parent=1 // loop_header_branch
      %17 = sbr.rel (%p15) target = $region8
    $region5: #{tpu_custom_call.1} parent=1 // loop_body
      %s19 = ssub.s32 %s14, 1
      %s20 = ssub.s32 %s14, 2
      %s27 = sadd.s32 1, %s22
      %p28 = scmp.ge.s32.totalorder %s27, 2
      %s29 = scalar_select %p28, 0, %s27
      %s30 = sadd.s32 1, %s21
      %s31 = scalar_select %p28, %s30, %s21
      %p32 = scmp.ge.s32.totalorder %s31, 2
      %s33 = scalar_select %p32, 0, %s31
      %s34 = smul.u32 %s21, 2
      %s35 = sadd.s32 %s34, %s22
      %s36 = smul.u32 %s33, 2
      %s37 = sadd.s32 %s36, %s29
      %s38 = ssub.s32 %s35, %s37
      %p39 = scmp.eq.s32.totalorder %s38, 0
      %s41 = sadd.s32 %s40, 1
      %s42 = scalar_select %p39, %s40, %s41
      %p45 = pneg %p39
      %p46 = scmp.eq.s32.totalorder %s14, 3
      %p47 = por %p45, %p46
      %p48 = scmp.ne.s32.totalorder %s40, %s43
      %p49 = scmp.eq.s32.totalorder %s14, 0
      %p50 = por %p48, %p49
      %p51 = scmp.ne.s32.totalorder %s40, %s43
      %p52 = scmp.eq.s32.totalorder %s19, 3
      %p53 = por %p51, %p52
      %p54 = scmp.ne.s32.totalorder %s43, %s44
      %p55 = scmp.eq.s32.totalorder %s19, 0
      %p56 = por %p54, %p55
      %p57 = scmp.ne.s32.totalorder %s43, %s44
      %p58 = scmp.eq.s32.totalorder %s20, 3
      %p59 = por %p57, %p58
      %p61 = scmp.ne.s32.totalorder %s44, %s60
      %p62 = scmp.eq.s32.totalorder %s20, 0
      %p63 = por %p61, %p62
      %s65 = sadd.s32 %s64, 1
      %p68 = scmp.eq.s32.totalorder %s14, 3
      %p69 = scmp.ne.s32.totalorder %s64, %s66
      %p70 = scmp.eq.s32.totalorder %s14, 0
      %p71 = por %p69, %p70
      %p72 = scmp.ne.s32.totalorder %s64, %s66
      %p73 = scmp.eq.s32.totalorder %s19, 3
      %p74 = por %p72, %p73
      %p75 = scmp.ne.s32.totalorder %s66, %s67
      %p76 = scmp.eq.s32.totalorder %s19, 0
      %p77 = por %p75, %p76
      %p78 = scmp.ne.s32.totalorder %s66, %s67
      %p79 = scmp.eq.s32.totalorder %s20, 3
      %p80 = por %p78, %p79
      %p82 = scmp.ne.s32.totalorder %s67, %s81
      %p83 = scmp.eq.s32.totalorder %s20, 0
      %p84 = por %p82, %p83
      %s86 = sadd.s32 %s85, 1
      %p89 = scmp.eq.s32.totalorder %s14, 3
      %p90 = scmp.ne.s32.totalorder %s85, %s87
      %p91 = scmp.eq.s32.totalorder %s14, 0
      %p92 = por %p90, %p91
      %p93 = scmp.ne.s32.totalorder %s85, %s87
      %p94 = scmp.eq.s32.totalorder %s19, 3
      %p95 = por %p93, %p94
      %p96 = scmp.ne.s32.totalorder %s87, %s88
      %p97 = scmp.eq.s32.totalorder %s19, 0
      %p98 = por %p96, %p97
      %p99 = scmp.ne.s32.totalorder %s87, %s88
      %p100 = scmp.eq.s32.totalorder %s20, 3
      %p101 = por %p99, %p100
      %p103 = scmp.ne.s32.totalorder %s88, %s102
      %p104 = scmp.eq.s32.totalorder %s20, 0
      %p105 = por %p103, %p104
      %s107 = sadd.s32 %s106, 1
      %p110 = scmp.eq.s32.totalorder %s14, 3
      %p111 = scmp.ne.s32.totalorder %s106, %s108
      %p112 = scmp.eq.s32.totalorder %s14, 0
      %p113 = por %p111, %p112
      %p114 = scmp.ne.s32.totalorder %s106, %s108
      %p115 = scmp.eq.s32.totalorder %s19, 3
      %p116 = por %p114, %p115
      %p117 = scmp.ne.s32.totalorder %s108, %s109
      %p118 = scmp.eq.s32.totalorder %s19, 0
      %p119 = por %p117, %p118
      %p120 = scmp.ne.s32.totalorder %s108, %s109
      %p121 = scmp.eq.s32.totalorder %s20, 3
      %p122 = por %p120, %p121
      %p124 = scmp.ne.s32.totalorder %s109, %s123
      %p125 = scmp.eq.s32.totalorder %s20, 0
      %p126 = por %p124, %p125
      %s128 = sadd.s32 %s127, 1
      %p131 = scmp.eq.s32.totalorder %s14, 3
      %p132 = scmp.ne.s32.totalorder %s127, %s129
      %p133 = scmp.eq.s32.totalorder %s14, 0
      %p134 = por %p132, %p133
      %p135 = scmp.ne.s32.totalorder %s127, %s129
      %p136 = scmp.eq.s32.totalorder %s19, 3
      %p137 = por %p135, %p136
      %p138 = scmp.ne.s32.totalorder %s129, %s130
      %p139 = scmp.eq.s32.totalorder %s19, 0
      %p140 = por %p138, %p139
      %p141 = scmp.ne.s32.totalorder %s129, %s130
      %p142 = scmp.eq.s32.totalorder %s20, 3
      %p143 = por %p141, %p142
      %p145 = scmp.ne.s32.totalorder %s130, %s144
      %p146 = scmp.eq.s32.totalorder %s20, 0
      %p147 = por %p145, %p146
      %s148 = ssub.s32 %s21, %s33
      %s149 = ssub.s32 %s22, %s29
      %s150 = sor.u32 %s148, %s149
      %p151 = scmp.eq.s32.totalorder %s150, 0
      %s153 = sadd.s32 %s152, 1
      %s154 = scalar_select %p151, %s152, %s153
      %p157 = pneg %p151
      %p158 = scmp.eq.s32.totalorder %s14, 3
      %p159 = por %p157, %p158
      %p160 = scmp.ne.s32.totalorder %s152, %s155
      %p161 = scmp.eq.s32.totalorder %s14, 0
      %p162 = por %p160, %p161
      %p163 = scmp.ne.s32.totalorder %s152, %s155
      %p164 = scmp.eq.s32.totalorder %s19, 3
      %p165 = por %p163, %p164
      %p166 = scmp.ne.s32.totalorder %s155, %s156
      %p167 = scmp.eq.s32.totalorder %s19, 0
      %p168 = por %p166, %p167
      %p169 = scmp.ne.s32.totalorder %s155, %s156
      %p170 = scmp.eq.s32.totalorder %s20, 3
      %p171 = por %p169, %p170
      %p173 = scmp.ne.s32.totalorder %s156, %s172
      %p174 = scmp.eq.s32.totalorder %s20, 0
      %p175 = por %p173, %p174
      %p176 = scmp.le.s32.totalorder 1, %s14
      %p177 = scmp.lt.s32.totalorder %s14, 5
      %p178 = pnand %p176, %p177
      %p179 = pneg %p178
      // Predicated region
      $region9: #{tpu_custom_call.1} parent=5 // pred_check
        _
      $region10: #{tpu_custom_call.1} parent=5 // pred_check_branch
        %181 = sbr.rel (%p178) target = $region12
      $region11: #{tpu_custom_call.1} parent=5 // pred_region
        %s182 = ssub.s32 %s14, 1
        // Predicated region
        $region13: #{tpu_custom_call.1} parent=11 // pred_check
          %p183 = pneg %p77
        $region14: #{tpu_custom_call.1} parent=11 // pred_check_branch
          %185 = sbr.rel (%p183) target = $region16
        $region15: #{tpu_custom_call.1} parent=11 // pred_region
          _
        $region16: #{tpu_custom_call.1} parent=11 // pred_fallthru
          _
        // Predicated region
        $region17: #{tpu_custom_call.1} parent=11 // pred_check
          %p186 = pneg %p98
        $region18: #{tpu_custom_call.1} parent=11 // pred_check_branch
          %188 = sbr.rel (%p186) target = $region20
        $region19: #{tpu_custom_call.1} parent=11 // pred_region
          _
        $region20: #{tpu_custom_call.1} parent=11 // pred_fallthru
          _
        // Predicated region
        $region21: #{tpu_custom_call.1} parent=11 // pred_check
          %p189 = pneg %p119
        $region22: #{tpu_custom_call.1} parent=11 // pred_check_branch
          %191 = sbr.rel (%p189) target = $region24
        $region23: #{tpu_custom_call.1} parent=11 // pred_region
          _
        $region24: #{tpu_custom_call.1} parent=11 // pred_fallthru
          _
        // Predicated region
        $region25: #{tpu_custom_call.1} parent=11 // pred_check
          %p192 = pneg %p140
        $region26: #{tpu_custom_call.1} parent=11 // pred_check_branch
          %194 = sbr.rel (%p192) target = $region28
        $region27: #{tpu_custom_call.1} parent=11 // pred_region
          _
        $region28: #{tpu_custom_call.1} parent=11 // pred_fallthru
          _
      $region12: #{tpu_custom_call.1} parent=5 // pred_fallthru
        _
      %p195 = scmp.lt.s32.totalorder %s14, 4
      // Predicated region
      $region29: #{tpu_custom_call.1} parent=5 // pred_check
        %p196 = pneg %p195
      $region30: #{tpu_custom_call.1} parent=5 // pred_check_branch
        %198 = sbr.rel (%p196) target = $region32
      $region31: #{tpu_custom_call.1} parent=5 // pred_region
        // Predicated region
        $region33: #{tpu_custom_call.1} parent=31 // pred_check
          %p199 = pneg %p50
        $region34: #{tpu_custom_call.1} parent=31 // pred_check_branch
          %201 = sbr.rel (%p199) target = $region36
        $region35: #{tpu_custom_call.1} parent=31 // pred_region
          %s202 = smul.u32 %s21, 2
          %s203 = sadd.s32 %s202, %s22
          %p204 = scmp.lt.s32.totalorder %s203, 3
          %s205 = scalar_select %p204, %s203, 3
          %s206 = smul.addr %s205, 30
          %s207 = smul.addr %s206, 4
          %s208 = scalar_lea.vmem %s0, %s207
          %s209 = smul.u32 %s21, 2
          %s210 = sadd.s32 %s209, %s22
        $region36: #{tpu_custom_call.1} parent=31 // pred_fallthru
          _
      $region32: #{tpu_custom_call.1} parent=5 // pred_fallthru
        _
      %p211 = scmp.le.s32.totalorder 1, %s14
      %p212 = scmp.lt.s32.totalorder %s14, 5
      %p213 = pnand %p211, %p212
      %p214 = pneg %p213
      // Predicated region
      $region37: #{tpu_custom_call.1} parent=5 // pred_check
        _
      $region38: #{tpu_custom_call.1} parent=5 // pred_check_branch
        %216 = sbr.rel (%p213) target = $region40
      $region39: #{tpu_custom_call.1} parent=5 // pred_region
        %s217 = ssub.s32 %s14, 1
        %s218 = smul.u32 %s23, 2
        %s219 = sadd.s32 %s218, %s24
        %p220 = scmp.lt.s32.totalorder %s219, 3
        %s221 = scalar_select %p220, %s219, 3
        %s222 = smul.addr %s221, 30
        %s223 = smul.addr %s222, 4
        %s224 = scalar_lea.vmem %s0, %s223
        %p225 = pneg %p56
        %p226 = pneg %p53
        %p227 = pneg %p77
        %p228 = pneg %p74
        %p229 = pneg %p98
        %p230 = pneg %p95
        %p231 = pneg %p119
        %p232 = pneg %p116
        %p233 = pneg %p140
        %p234 = pneg %p137
        %p235 = pneg %p168
        %p236 = pneg %p165
        %s237 = sand.u32 %s155, 1
        %s238 = scalar_lea.sflag [#allocation3], %s237
        %s239 = sand.u32 %s155, 1
        %s240 = smul.addr %s239, 128
        %s241 = scalar_lea.vmem [#allocation2], %s240
        %s242 = smul.u32 %s23, 2
        %s243 = sadd.s32 %s242, %s24
        %p244 = scmp.lt.s32.totalorder %s243, 3
        %s245 = scalar_select %p244, %s243, 3
        %s246 = smul.addr %s245, 30
        %s247 = smul.addr %s246, 4
        %s248 = scalar_lea.vmem %s0, %s247
        %s249 = smul.u32 %s23, 2
        %s250 = sadd.s32 %s249, %s24
        %s251 = smul.u32 8, %s24
        %v253 = vld [vmem:[%s248] sm:$0xf]
        %v254 = vld [vmem:[%s248 + $0x4] sm:$0xf]
        %v255 = vld [vmem:[%s248 + $0xc] sm:$0xf]
        %v256 = vld [vmem:[%s248 + $0x10] sm:$0xf]
        %v257 = vld [vmem:[%s248 + $0x18] sm:$0xf]
        %v258 = vld [vmem:[%s248 + $0x1c] sm:$0xf]
        %v259 = vld [vmem:[%s248 + $0x24] sm:$0xf]
        %v260 = vld [vmem:[%s248 + $0x28] sm:$0xf]
        %v261 = vld [vmem:[%s248 + $0x30] sm:$0xf]
        %v262 = vld [vmem:[%s248 + $0x34] sm:$0xf]
        %v263 = vld [vmem:[%s248 + $0x3c] sm:$0xf]
        %v264 = vld [vmem:[%s248 + $0x40] sm:$0xf]
        %v265 = vld [vmem:[%s248 + $0x48] sm:$0xf]
        %v266 = vld [vmem:[%s248 + $0x4c] sm:$0xf]
        %v267 = vld [vmem:[%s248 + $0x54] sm:$0xf]
        %v268 = vld [vmem:[%s248 + $0x58] sm:$0xf]
        %v269 = vld [vmem:[%s248 + $0x8] sm:$0x1]
        %v270 = vld [vmem:[%s248 + $0x14] sm:$0x1]
        %v271 = vld [vmem:[%s248 + $0x20] sm:$0x1]
        %v272 = vld [vmem:[%s248 + $0x2c] sm:$0x1]
        %v273 = vld [vmem:[%s248 + $0x38] sm:$0x1]
        %v274 = vld [vmem:[%s248 + $0x44] sm:$0x1]
        %v275 = vld [vmem:[%s248 + $0x50] sm:$0x1]
        %v276 = vld [vmem:[%s248 + $0x5c] sm:$0x1]
        %vm277 = vsmask.f32 3328
        %vm278 = vsmask.f32 7440
        %vm279 = vmor %vm277, %vm278
        %v281 = vshrl.u32 %v253, 16
        %v283 = vrot.slane %v281, 4
        %v284 = vshll.u32 %v253, 16
        %v286 = vrot.slane %v284, 5
        %v287 = vor.u32 %v283, %v286
        %v288 = vrot.slane %v287, 4
        %v290 = vshll.u32 %v254, 16
        %v292 = vrot.slane %v290, 5
        %v293 = vsel %vm279, %v288, %v292
        %v294 = vshrl.u32 %v254, 16
        %v296 = vrot.slane %v294, 4
        %v297 = vor.u32 %v296, %v292
        %v298 = vrot.slane %v297, 4
        %v300 = vshll.u32 %v269, 16
        %v302 = vrot.slane %v300, 5
        %v303 = vsel %vm279, %v298, %v302
        %v305 = vshrl.u32 %v255, 16
        %v307 = vrot.slane %v305, 4
        %v308 = vshll.u32 %v255, 16
        %v310 = vrot.slane %v308, 5
        %v311 = vor.u32 %v307, %v310
        %v312 = vrot.slane %v311, 4
        %v314 = vshll.u32 %v256, 16
        %v316 = vrot.slane %v314, 5
        %v317 = vsel %vm279, %v312, %v316
        %v318 = vshrl.u32 %v256, 16
        %v320 = vrot.slane %v318, 4
        %v321 = vor.u32 %v320, %v316
        %v322 = vrot.slane %v321, 4
        %v324 = vshll.u32 %v270, 16
        %v326 = vrot.slane %v324, 5
        %v327 = vsel %vm279, %v322, %v326
        %v329 = vshrl.u32 %v257, 16
        %v331 = vrot.slane %v329, 4
        %v332 = vshll.u32 %v257, 16
        %v334 = vrot.slane %v332, 5
        %v335 = vor.u32 %v331, %v334
        %v336 = vrot.slane %v335, 4
        %v338 = vshll.u32 %v258, 16
        %v340 = vrot.slane %v338, 5
        %v341 = vsel %vm279, %v336, %v340
        %v342 = vshrl.u32 %v258, 16
        %v344 = vrot.slane %v342, 4
        %v345 = vor.u32 %v344, %v340
        %v346 = vrot.slane %v345, 4
        %v348 = vshll.u32 %v271, 16
        %v350 = vrot.slane %v348, 5
        %v351 = vsel %vm279, %v346, %v350
        %v353 = vshrl.u32 %v259, 16
        %v355 = vrot.slane %v353, 4
        %v356 = vshll.u32 %v259, 16
        %v358 = vrot.slane %v356, 5
        %v359 = vor.u32 %v355, %v358
        %v360 = vrot.slane %v359, 4
        %v362 = vshll.u32 %v260, 16
        %v364 = vrot.slane %v362, 5
        %v365 = vsel %vm279, %v360, %v364
        %v366 = vshrl.u32 %v260, 16
        %v368 = vrot.slane %v366, 4
        %v369 = vor.u32 %v368, %v364
        %v370 = vrot.slane %v369, 4
        %v372 = vshll.u32 %v272, 16
        %v374 = vrot.slane %v372, 5
        %v375 = vsel %vm279, %v370, %v374
        %v377 = vshrl.u32 %v261, 16
        %v379 = vrot.slane %v377, 4
        %v380 = vshll.u32 %v261, 16
        %v382 = vrot.slane %v380, 5
        %v383 = vor.u32 %v379, %v382
        %v384 = vrot.slane %v383, 4
        %v386 = vshll.u32 %v262, 16
        %v388 = vrot.slane %v386, 5
        %v389 = vsel %vm279, %v384, %v388
        %v390 = vshrl.u32 %v262, 16
        %v392 = vrot.slane %v390, 4
        %v393 = vor.u32 %v392, %v388
        %v394 = vrot.slane %v393, 4
        %v396 = vshll.u32 %v273, 16
        %v398 = vrot.slane %v396, 5
        %v399 = vsel %vm279, %v394, %v398
        %v401 = vshrl.u32 %v263, 16
        %v403 = vrot.slane %v401, 4
        %v404 = vshll.u32 %v263, 16
        %v406 = vrot.slane %v404, 5
        %v407 = vor.u32 %v403, %v406
        %v408 = vrot.slane %v407, 4
        %v410 = vshll.u32 %v264, 16
        %v412 = vrot.slane %v410, 5
        %v413 = vsel %vm279, %v408, %v412
        %v414 = vshrl.u32 %v264, 16
        %v416 = vrot.slane %v414, 4
        %v417 = vor.u32 %v416, %v412
        %v418 = vrot.slane %v417, 4
        %v420 = vshll.u32 %v274, 16
        %v422 = vrot.slane %v420, 5
        %v423 = vsel %vm279, %v418, %v422
        %v425 = vshrl.u32 %v265, 16
        %v427 = vrot.slane %v425, 4
        %v428 = vshll.u32 %v265, 16
        %v430 = vrot.slane %v428, 5
        %v431 = vor.u32 %v427, %v430
        %v432 = vrot.slane %v431, 4
        %v434 = vshll.u32 %v266, 16
        %v436 = vrot.slane %v434, 5
        %v437 = vsel %vm279, %v432, %v436
        %v438 = vshrl.u32 %v266, 16
        %v440 = vrot.slane %v438, 4
        %v441 = vor.u32 %v440, %v436
        %v442 = vrot.slane %v441, 4
        %v444 = vshll.u32 %v275, 16
        %v446 = vrot.slane %v444, 5
        %v447 = vsel %vm279, %v442, %v446
        %v449 = vshrl.u32 %v267, 16
        %v451 = vrot.slane %v449, 4
        %v452 = vshll.u32 %v267, 16
        %v454 = vrot.slane %v452, 5
        %v455 = vor.u32 %v451, %v454
        %v456 = vrot.slane %v455, 4
        %v458 = vshll.u32 %v268, 16
        %v460 = vrot.slane %v458, 5
        %v461 = vsel %vm279, %v456, %v460
        %v462 = vshrl.u32 %v268, 16
        %v464 = vrot.slane %v462, 4
        %v465 = vor.u32 %v464, %v460
        %v466 = vrot.slane %v465, 4
        %v468 = vshll.u32 %v276, 16
        %v470 = vrot.slane %v468, 5
        %v471 = vsel %vm279, %v466, %v470
        %v472 = vld [vmem:[%s248] sm:$0xe]
        %v473 = vld [vmem:[%s248 + $0xc] sm:$0xe]
        %v474 = vld [vmem:[%s248 + $0x18] sm:$0xe]
        %v475 = vld [vmem:[%s248 + $0x24] sm:$0xe]
        %v476 = vld [vmem:[%s248 + $0x30] sm:$0xe]
        %v477 = vld [vmem:[%s248 + $0x3c] sm:$0xe]
        %v478 = vld [vmem:[%s248 + $0x48] sm:$0xe]
        %v479 = vld [vmem:[%s248 + $0x54] sm:$0xe]
        %vm504 = vcmask 1042432
        %vm505 = vcmask 1046532
        %vm506 = vmor %vm504, %vm505
        %v507 = vrot.slane %v472, 5
        %v508 = vrot.slane %v507, 4
        %v509 = vrot.slane %v254, 5
        %v510 = vsel %vm506, %v508, %v509
        %v511 = vrot.slane %v509, 4
        %v512 = vrot.slane %v269, 5
        %v513 = vsel %vm506, %v511, %v512
        %v514 = vrot.slane %v473, 5
        %v515 = vrot.slane %v514, 4
        %v516 = vrot.slane %v256, 5
        %v517 = vsel %vm506, %v515, %v516
        %v518 = vrot.slane %v516, 4
        %v519 = vrot.slane %v270, 5
        %v520 = vsel %vm506, %v518, %v519
        %v521 = vrot.slane %v474, 5
        %v522 = vrot.slane %v521, 4
        %v523 = vrot.slane %v258, 5
        %v524 = vsel %vm506, %v522, %v523
        %v525 = vrot.slane %v523, 4
        %v526 = vrot.slane %v271, 5
        %v527 = vsel %vm506, %v525, %v526
        %v528 = vrot.slane %v475, 5
        %v529 = vrot.slane %v528, 4
        %v530 = vrot.slane %v260, 5
        %v531 = vsel %vm506, %v529, %v530
        %v532 = vrot.slane %v530, 4
        %v533 = vrot.slane %v272, 5
        %v534 = vsel %vm506, %v532, %v533
        %v535 = vrot.slane %v476, 5
        %v536 = vrot.slane %v535, 4
        %v537 = vrot.slane %v262, 5
        %v538 = vsel %vm506, %v536, %v537
        %v539 = vrot.slane %v537, 4
        %v540 = vrot.slane %v273, 5
        %v541 = vsel %vm506, %v539, %v540
        %v542 = vrot.slane %v477, 5
        %v543 = vrot.slane %v542, 4
        %v544 = vrot.slane %v264, 5
        %v545 = vsel %vm506, %v543, %v544
        %v546 = vrot.slane %v544, 4
        %v547 = vrot.slane %v274, 5
        %v548 = vsel %vm506, %v546, %v547
        %v549 = vrot.slane %v478, 5
        %v550 = vrot.slane %v549, 4
        %v551 = vrot.slane %v266, 5
        %v552 = vsel %vm506, %v550, %v551
        %v553 = vrot.slane %v551, 4
        %v554 = vrot.slane %v275, 5
        %v555 = vsel %vm506, %v553, %v554
        %v556 = vrot.slane %v479, 5
        %v557 = vrot.slane %v556, 4
        %v558 = vrot.slane %v268, 5
        %v559 = vsel %vm506, %v557, %v558
        %v560 = vrot.slane %v558, 4
        %v561 = vrot.slane %v276, 5
        %v562 = vsel %vm506, %v560, %v561
        %s563 = scalar_lea.vmem %s248, 12
        %v564 = vld [vmem:[%s563] sm:$0xf]
        %v565 = vld [vmem:[%s563 + $0x4] sm:$0xf]
        %v566 = vld [vmem:[%s563 + $0xc] sm:$0xf]
        %v567 = vld [vmem:[%s563 + $0x10] sm:$0xf]
        %v568 = vld [vmem:[%s563 + $0x18] sm:$0xf]
        %v569 = vld [vmem:[%s563 + $0x1c] sm:$0xf]
        %v570 = vld [vmem:[%s563 + $0x24] sm:$0xf]
        %v571 = vld [vmem:[%s563 + $0x28] sm:$0xf]
        %v572 = vld [vmem:[%s563 + $0x30] sm:$0xf]
        %v573 = vld [vmem:[%s563 + $0x34] sm:$0xf]
        %v574 = vld [vmem:[%s563 + $0x3c] sm:$0xf]
        %v575 = vld [vmem:[%s563 + $0x40] sm:$0xf]
        %v576 = vld [vmem:[%s563 + $0x48] sm:$0xf]
        %v577 = vld [vmem:[%s563 + $0x4c] sm:$0xf]
        %v578 = vld [vmem:[%s563 + $0x54] sm:$0xf]
        %v579 = vld [vmem:[%s563 + $0x58] sm:$0xf]
        %v580 = vld [vmem:[%s563 + $0x8] sm:$0x1]
        %v581 = vld [vmem:[%s563 + $0x14] sm:$0x1]
        %v582 = vld [vmem:[%s563 + $0x20] sm:$0x1]
        %v583 = vld [vmem:[%s563 + $0x2c] sm:$0x1]
        %v584 = vld [vmem:[%s563 + $0x38] sm:$0x1]
        %v585 = vld [vmem:[%s563 + $0x44] sm:$0x1]
        %v586 = vld [vmem:[%s563 + $0x50] sm:$0x1]
        %v587 = vld [vmem:[%s563 + $0x5c] sm:$0x1]
        %v589 = vshrl.u32 %v564, 16
        %v591 = vrot.slane %v589, 4
        %v592 = vshll.u32 %v564, 16
        %v594 = vrot.slane %v592, 5
        %v595 = vor.u32 %v591, %v594
        %v596 = vrot.slane %v595, 4
        %v598 = vshll.u32 %v565, 16
        %v600 = vrot.slane %v598, 5
        %v601 = vsel %vm279, %v596, %v600
        %v602 = vshrl.u32 %v565, 16
        %v604 = vrot.slane %v602, 4
        %v605 = vor.u32 %v604, %v600
        %v606 = vrot.slane %v605, 4
        %v608 = vshll.u32 %v580, 16
        %v610 = vrot.slane %v608, 5
        %v611 = vsel %vm279, %v606, %v610
        %v613 = vshrl.u32 %v566, 16
        %v615 = vrot.slane %v613, 4
        %v616 = vshll.u32 %v566, 16
        %v618 = vrot.slane %v616, 5
        %v619 = vor.u32 %v615, %v618
        %v620 = vrot.slane %v619, 4
        %v622 = vshll.u32 %v567, 16
        %v624 = vrot.slane %v622, 5
        %v625 = vsel %vm279, %v620, %v624
        %v626 = vshrl.u32 %v567, 16
        %v628 = vrot.slane %v626, 4
        %v629 = vor.u32 %v628, %v624
        %v630 = vrot.slane %v629, 4
        %v632 = vshll.u32 %v581, 16
        %v634 = vrot.slane %v632, 5
        %v635 = vsel %vm279, %v630, %v634
        %v637 = vshrl.u32 %v568, 16
        %v639 = vrot.slane %v637, 4
        %v640 = vshll.u32 %v568, 16
        %v642 = vrot.slane %v640, 5
        %v643 = vor.u32 %v639, %v642
        %v644 = vrot.slane %v643, 4
        %v646 = vshll.u32 %v569, 16
        %v648 = vrot.slane %v646, 5
        %v649 = vsel %vm279, %v644, %v648
        %v650 = vshrl.u32 %v569, 16
        %v652 = vrot.slane %v650, 4
        %v653 = vor.u32 %v652, %v648
        %v654 = vrot.slane %v653, 4
        %v656 = vshll.u32 %v582, 16
        %v658 = vrot.slane %v656, 5
        %v659 = vsel %vm279, %v654, %v658
        %v661 = vshrl.u32 %v570, 16
        %v663 = vrot.slane %v661, 4
        %v664 = vshll.u32 %v570, 16
        %v666 = vrot.slane %v664, 5
        %v667 = vor.u32 %v663, %v666
        %v668 = vrot.slane %v667, 4
        %v670 = vshll.u32 %v571, 16
        %v672 = vrot.slane %v670, 5
        %v673 = vsel %vm279, %v668, %v672
        %v674 = vshrl.u32 %v571, 16
        %v676 = vrot.slane %v674, 4
        %v677 = vor.u32 %v676, %v672
        %v678 = vrot.slane %v677, 4
        %v680 = vshll.u32 %v583, 16
        %v682 = vrot.slane %v680, 5
        %v683 = vsel %vm279, %v678, %v682
        %v685 = vshrl.u32 %v572, 16
        %v687 = vrot.slane %v685, 4
        %v688 = vshll.u32 %v572, 16
        %v690 = vrot.slane %v688, 5
        %v691 = vor.u32 %v687, %v690
        %v692 = vrot.slane %v691, 4
        %v694 = vshll.u32 %v573, 16
        %v696 = vrot.slane %v694, 5
        %v697 = vsel %vm279, %v692, %v696
        %v698 = vshrl.u32 %v573, 16
        %v700 = vrot.slane %v698, 4
        %v701 = vor.u32 %v700, %v696
        %v702 = vrot.slane %v701, 4
        %v704 = vshll.u32 %v584, 16
        %v706 = vrot.slane %v704, 5
        %v707 = vsel %vm279, %v702, %v706
        %v709 = vshrl.u32 %v574, 16
        %v711 = vrot.slane %v709, 4
        %v712 = vshll.u32 %v574, 16
        %v714 = vrot.slane %v712, 5
        %v715 = vor.u32 %v711, %v714
        %v716 = vrot.slane %v715, 4
        %v718 = vshll.u32 %v575, 16
        %v720 = vrot.slane %v718, 5
        %v721 = vsel %vm279, %v716, %v720
        %v722 = vshrl.u32 %v575, 16
        %v724 = vrot.slane %v722, 4
        %v725 = vor.u32 %v724, %v720
        %v726 = vrot.slane %v725, 4
        %v728 = vshll.u32 %v585, 16
        %v730 = vrot.slane %v728, 5
        %v731 = vsel %vm279, %v726, %v730
        %v733 = vshrl.u32 %v576, 16
        %v735 = vrot.slane %v733, 4
        %v736 = vshll.u32 %v576, 16
        %v738 = vrot.slane %v736, 5
        %v739 = vor.u32 %v735, %v738
        %v740 = vrot.slane %v739, 4
        %v742 = vshll.u32 %v577, 16
        %v744 = vrot.slane %v742, 5
        %v745 = vsel %vm279, %v740, %v744
        %v746 = vshrl.u32 %v577, 16
        %v748 = vrot.slane %v746, 4
        %v749 = vor.u32 %v748, %v744
        %v750 = vrot.slane %v749, 4
        %v752 = vshll.u32 %v586, 16
        %v754 = vrot.slane %v752, 5
        %v755 = vsel %vm279, %v750, %v754
        %v757 = vshrl.u32 %v578, 16
        %v759 = vrot.slane %v757, 4
        %v760 = vshll.u32 %v578, 16
        %v762 = vrot.slane %v760, 5
        %v763 = vor.u32 %v759, %v762
        %v764 = vrot.slane %v763, 4
        %v766 = vshll.u32 %v579, 16
        %v768 = vrot.slane %v766, 5
        %v769 = vsel %vm279, %v764, %v768
        %v770 = vshrl.u32 %v579, 16
        %v772 = vrot.slane %v770, 4
        %v773 = vor.u32 %v772, %v768
        %v774 = vrot.slane %v773, 4
        %v776 = vshll.u32 %v587, 16
        %v778 = vrot.slane %v776, 5
        %v779 = vsel %vm279, %v774, %v778
        %v780 = vld [vmem:[%s563] sm:$0xe]
        %v781 = vld [vmem:[%s563 + $0xc] sm:$0xe]
        %v782 = vld [vmem:[%s563 + $0x18] sm:$0xe]
        %v783 = vld [vmem:[%s563 + $0x24] sm:$0xe]
        %v784 = vld [vmem:[%s563 + $0x30] sm:$0xe]
        %v785 = vld [vmem:[%s563 + $0x3c] sm:$0xe]
        %v786 = vld [vmem:[%s563 + $0x48] sm:$0xe]
        %v787 = vld [vmem:[%s563 + $0x54] sm:$0xe]
        %v812 = vrot.slane %v780, 5
        %v813 = vrot.slane %v812, 4
        %v814 = vrot.slane %v565, 5
        %v815 = vsel %vm506, %v813, %v814
        %v816 = vrot.slane %v814, 4
        %v817 = vrot.slane %v580, 5
        %v818 = vsel %vm506, %v816, %v817
        %v819 = vrot.slane %v781, 5
        %v820 = vrot.slane %v819, 4
        %v821 = vrot.slane %v567, 5
        %v822 = vsel %vm506, %v820, %v821
        %v823 = vrot.slane %v821, 4
        %v824 = vrot.slane %v581, 5
        %v825 = vsel %vm506, %v823, %v824
        %v826 = vrot.slane %v782, 5
        %v827 = vrot.slane %v826, 4
        %v828 = vrot.slane %v569, 5
        %v829 = vsel %vm506, %v827, %v828
        %v830 = vrot.slane %v828, 4
        %v831 = vrot.slane %v582, 5
        %v832 = vsel %vm506, %v830, %v831
        %v833 = vrot.slane %v783, 5
        %v834 = vrot.slane %v833, 4
        %v835 = vrot.slane %v571, 5
        %v836 = vsel %vm506, %v834, %v835
        %v837 = vrot.slane %v835, 4
        %v838 = vrot.slane %v583, 5
        %v839 = vsel %vm506, %v837, %v838
        %v840 = vrot.slane %v784, 5
        %v841 = vrot.slane %v840, 4
        %v842 = vrot.slane %v573, 5
        %v843 = vsel %vm506, %v841, %v842
        %v844 = vrot.slane %v842, 4
        %v845 = vrot.slane %v584, 5
        %v846 = vsel %vm506, %v844, %v845
        %v847 = vrot.slane %v785, 5
        %v848 = vrot.slane %v847, 4
        %v849 = vrot.slane %v575, 5
        %v850 = vsel %vm506, %v848, %v849
        %v851 = vrot.slane %v849, 4
        %v852 = vrot.slane %v585, 5
        %v853 = vsel %vm506, %v851, %v852
        %v854 = vrot.slane %v786, 5
        %v855 = vrot.slane %v854, 4
        %v856 = vrot.slane %v577, 5
        %v857 = vsel %vm506, %v855, %v856
        %v858 = vrot.slane %v856, 4
        %v859 = vrot.slane %v586, 5
        %v860 = vsel %vm506, %v858, %v859
        %v861 = vrot.slane %v787, 5
        %v862 = vrot.slane %v861, 4
        %v863 = vrot.slane %v579, 5
        %v864 = vsel %vm506, %v862, %v863
        %v865 = vrot.slane %v863, 4
        %v866 = vrot.slane %v587, 5
        %v867 = vsel %vm506, %v865, %v866
        %s868 = scalar_lea.vmem %s248, 24
        %v869 = vld [vmem:[%s868] sm:$0xf]
        %v870 = vld [vmem:[%s868 + $0x4] sm:$0xf]
        %v871 = vld [vmem:[%s868 + $0xc] sm:$0xf]
        %v872 = vld [vmem:[%s868 + $0x10] sm:$0xf]
        %v873 = vld [vmem:[%s868 + $0x18] sm:$0xf]
        %v874 = vld [vmem:[%s868 + $0x1c] sm:$0xf]
        %v875 = vld [vmem:[%s868 + $0x24] sm:$0xf]
        %v876 = vld [vmem:[%s868 + $0x28] sm:$0xf]
        %v877 = vld [vmem:[%s868 + $0x30] sm:$0xf]
        %v878 = vld [vmem:[%s868 + $0x34] sm:$0xf]
        %v879 = vld [vmem:[%s868 + $0x3c] sm:$0xf]
        %v880 = vld [vmem:[%s868 + $0x40] sm:$0xf]
        %v881 = vld [vmem:[%s868 + $0x48] sm:$0xf]
        %v882 = vld [vmem:[%s868 + $0x4c] sm:$0xf]
        %v883 = vld [vmem:[%s868 + $0x54] sm:$0xf]
        %v884 = vld [vmem:[%s868 + $0x58] sm:$0xf]
        %v885 = vld [vmem:[%s868 + $0x8] sm:$0x1]
        %v886 = vld [vmem:[%s868 + $0x14] sm:$0x1]
        %v887 = vld [vmem:[%s868 + $0x20] sm:$0x1]
        %v888 = vld [vmem:[%s868 + $0x2c] sm:$0x1]
        %v889 = vld [vmem:[%s868 + $0x38] sm:$0x1]
        %v890 = vld [vmem:[%s868 + $0x44] sm:$0x1]
        %v891 = vld [vmem:[%s868 + $0x50] sm:$0x1]
        %v892 = vld [vmem:[%s868 + $0x5c] sm:$0x1]
        %v894 = vshrl.u32 %v869, 16
        %v896 = vrot.slane %v894, 4
        %v897 = vshll.u32 %v869, 16
        %v899 = vrot.slane %v897, 5
        %v900 = vor.u32 %v896, %v899
        %v901 = vrot.slane %v900, 4
        %v903 = vshll.u32 %v870, 16
        %v905 = vrot.slane %v903, 5
        %v906 = vsel %vm279, %v901, %v905
        %v907 = vshrl.u32 %v870, 16
        %v909 = vrot.slane %v907, 4
        %v910 = vor.u32 %v909, %v905
        %v911 = vrot.slane %v910, 4
        %v913 = vshll.u32 %v885, 16
        %v915 = vrot.slane %v913, 5
        %v916 = vsel %vm279, %v911, %v915
        %v918 = vshrl.u32 %v871, 16
        %v920 = vrot.slane %v918, 4
        %v921 = vshll.u32 %v871, 16
        %v923 = vrot.slane %v921, 5
        %v924 = vor.u32 %v920, %v923
        %v925 = vrot.slane %v924, 4
        %v927 = vshll.u32 %v872, 16
        %v929 = vrot.slane %v927, 5
        %v930 = vsel %vm279, %v925, %v929
        %v931 = vshrl.u32 %v872, 16
        %v933 = vrot.slane %v931, 4
        %v934 = vor.u32 %v933, %v929
        %v935 = vrot.slane %v934, 4
        %v937 = vshll.u32 %v886, 16
        %v939 = vrot.slane %v937, 5
        %v940 = vsel %vm279, %v935, %v939
        %v942 = vshrl.u32 %v873, 16
        %v944 = vrot.slane %v942, 4
        %v945 = vshll.u32 %v873, 16
        %v947 = vrot.slane %v945, 5
        %v948 = vor.u32 %v944, %v947
        %v949 = vrot.slane %v948, 4
        %v951 = vshll.u32 %v874, 16
        %v953 = vrot.slane %v951, 5
        %v954 = vsel %vm279, %v949, %v953
        %v955 = vshrl.u32 %v874, 16
        %v957 = vrot.slane %v955, 4
        %v958 = vor.u32 %v957, %v953
        %v959 = vrot.slane %v958, 4
        %v961 = vshll.u32 %v887, 16
        %v963 = vrot.slane %v961, 5
        %v964 = vsel %vm279, %v959, %v963
        %v966 = vshrl.u32 %v875, 16
        %v968 = vrot.slane %v966, 4
        %v969 = vshll.u32 %v875, 16
        %v971 = vrot.slane %v969, 5
        %v972 = vor.u32 %v968, %v971
        %v973 = vrot.slane %v972, 4
        %v975 = vshll.u32 %v876, 16
        %v977 = vrot.slane %v975, 5
        %v978 = vsel %vm279, %v973, %v977
        %v979 = vshrl.u32 %v876, 16
        %v981 = vrot.slane %v979, 4
        %v982 = vor.u32 %v981, %v977
        %v983 = vrot.slane %v982, 4
        %v985 = vshll.u32 %v888, 16
        %v987 = vrot.slane %v985, 5
        %v988 = vsel %vm279, %v983, %v987
        %v990 = vshrl.u32 %v877, 16
        %v992 = vrot.slane %v990, 4
        %v993 = vshll.u32 %v877, 16
        %v995 = vrot.slane %v993, 5
        %v996 = vor.u32 %v992, %v995
        %v997 = vrot.slane %v996, 4
        %v999 = vshll.u32 %v878, 16
        %v1001 = vrot.slane %v999, 5
        %v1002 = vsel %vm279, %v997, %v1001
        %v1003 = vshrl.u32 %v878, 16
        %v1005 = vrot.slane %v1003, 4
        %v1006 = vor.u32 %v1005, %v1001
        %v1007 = vrot.slane %v1006, 4
        %v1009 = vshll.u32 %v889, 16
        %v1011 = vrot.slane %v1009, 5
        %v1012 = vsel %vm279, %v1007, %v1011
        %v1014 = vshrl.u32 %v879, 16
        %v1016 = vrot.slane %v1014, 4
        %v1017 = vshll.u32 %v879, 16
        %v1019 = vrot.slane %v1017, 5
        %v1020 = vor.u32 %v1016, %v1019
        %v1021 = vrot.slane %v1020, 4
        %v1023 = vshll.u32 %v880, 16
        %v1025 = vrot.slane %v1023, 5
        %v1026 = vsel %vm279, %v1021, %v1025
        %v1027 = vshrl.u32 %v880, 16
        %v1029 = vrot.slane %v1027, 4
        %v1030 = vor.u32 %v1029, %v1025
        %v1031 = vrot.slane %v1030, 4
        %v1033 = vshll.u32 %v890, 16
        %v1035 = vrot.slane %v1033, 5
        %v1036 = vsel %vm279, %v1031, %v1035
        %v1038 = vshrl.u32 %v881, 16
        %v1040 = vrot.slane %v1038, 4
        %v1041 = vshll.u32 %v881, 16
        %v1043 = vrot.slane %v1041, 5
        %v1044 = vor.u32 %v1040, %v1043
        %v1045 = vrot.slane %v1044, 4
        %v1047 = vshll.u32 %v882, 16
        %v1049 = vrot.slane %v1047, 5
        %v1050 = vsel %vm279, %v1045, %v1049
        %v1051 = vshrl.u32 %v882, 16
        %v1053 = vrot.slane %v1051, 4
        %v1054 = vor.u32 %v1053, %v1049
        %v1055 = vrot.slane %v1054, 4
        %v1057 = vshll.u32 %v891, 16
        %v1059 = vrot.slane %v1057, 5
        %v1060 = vsel %vm279, %v1055, %v1059
        %v1062 = vshrl.u32 %v883, 16
        %v1064 = vrot.slane %v1062, 4
        %v1065 = vshll.u32 %v883, 16
        %v1067 = vrot.slane %v1065, 5
        %v1068 = vor.u32 %v1064, %v1067
        %v1069 = vrot.slane %v1068, 4
        %v1071 = vshll.u32 %v884, 16
        %v1073 = vrot.slane %v1071, 5
        %v1074 = vsel %vm279, %v1069, %v1073
        %v1075 = vshrl.u32 %v884, 16
        %v1077 = vrot.slane %v1075, 4
        %v1078 = vor.u32 %v1077, %v1073
        %v1079 = vrot.slane %v1078, 4
        %v1081 = vshll.u32 %v892, 16
        %v1083 = vrot.slane %v1081, 5
        %v1084 = vsel %vm279, %v1079, %v1083
        %v1085 = vld [vmem:[%s868] sm:$0xe]
        %v1086 = vld [vmem:[%s868 + $0xc] sm:$0xe]
        %v1087 = vld [vmem:[%s868 + $0x18] sm:$0xe]
        %v1088 = vld [vmem:[%s868 + $0x24] sm:$0xe]
        %v1089 = vld [vmem:[%s868 + $0x30] sm:$0xe]
        %v1090 = vld [vmem:[%s868 + $0x3c] sm:$0xe]
        %v1091 = vld [vmem:[%s868 + $0x48] sm:$0xe]
        %v1092 = vld [vmem:[%s868 + $0x54] sm:$0xe]
        %v1117 = vrot.slane %v1085, 5
        %v1118 = vrot.slane %v1117, 4
        %v1119 = vrot.slane %v870, 5
        %v1120 = vsel %vm506, %v1118, %v1119
        %v1121 = vrot.slane %v1119, 4
        %v1122 = vrot.slane %v885, 5
        %v1123 = vsel %vm506, %v1121, %v1122
        %v1124 = vrot.slane %v1086, 5
        %v1125 = vrot.slane %v1124, 4
        %v1126 = vrot.slane %v872, 5
        %v1127 = vsel %vm506, %v1125, %v1126
        %v1128 = vrot.slane %v1126, 4
        %v1129 = vrot.slane %v886, 5
        %v1130 = vsel %vm506, %v1128, %v1129
        %v1131 = vrot.slane %v1087, 5
        %v1132 = vrot.slane %v1131, 4
        %v1133 = vrot.slane %v874, 5
        %v1134 = vsel %vm506, %v1132, %v1133
        %v1135 = vrot.slane %v1133, 4
        %v1136 = vrot.slane %v887, 5
        %v1137 = vsel %vm506, %v1135, %v1136
        %v1138 = vrot.slane %v1088, 5
        %v1139 = vrot.slane %v1138, 4
        %v1140 = vrot.slane %v876, 5
        %v1141 = vsel %vm506, %v1139, %v1140
        %v1142 = vrot.slane %v1140, 4
        %v1143 = vrot.slane %v888, 5
        %v1144 = vsel %vm506, %v1142, %v1143
        %v1145 = vrot.slane %v1089, 5
        %v1146 = vrot.slane %v1145, 4
        %v1147 = vrot.slane %v878, 5
        %v1148 = vsel %vm506, %v1146, %v1147
        %v1149 = vrot.slane %v1147, 4
        %v1150 = vrot.slane %v889, 5
        %v1151 = vsel %vm506, %v1149, %v1150
        %v1152 = vrot.slane %v1090, 5
        %v1153 = vrot.slane %v1152, 4
        %v1154 = vrot.slane %v880, 5
        %v1155 = vsel %vm506, %v1153, %v1154
        %v1156 = vrot.slane %v1154, 4
        %v1157 = vrot.slane %v890, 5
        %v1158 = vsel %vm506, %v1156, %v1157
        %v1159 = vrot.slane %v1091, 5
        %v1160 = vrot.slane %v1159, 4
        %v1161 = vrot.slane %v882, 5
        %v1162 = vsel %vm506, %v1160, %v1161
        %v1163 = vrot.slane %v1161, 4
        %v1164 = vrot.slane %v891, 5
        %v1165 = vsel %vm506, %v1163, %v1164
        %v1166 = vrot.slane %v1092, 5
        %v1167 = vrot.slane %v1166, 4
        %v1168 = vrot.slane %v884, 5
        %v1169 = vsel %vm506, %v1167, %v1168
        %v1170 = vrot.slane %v1168, 4
        %v1171 = vrot.slane %v892, 5
        %v1172 = vsel %vm506, %v1170, %v1171
        %v1181 = vunpack.c.l.b16 %v253
        %v1182 = vunpack.c.l.b16 %v254
        %v1183 = vunpack.c.l.b16 %v255
        %v1184 = vunpack.c.l.b16 %v256
        %v1185 = vunpack.c.l.b16 %v257
        %v1186 = vunpack.c.l.b16 %v258
        %v1187 = vunpack.c.l.b16 %v259
        %v1188 = vunpack.c.l.b16 %v260
        %v1189 = vunpack.c.l.b16 %v261
        %v1190 = vunpack.c.l.b16 %v262
        %v1191 = vunpack.c.l.b16 %v263
        %v1192 = vunpack.c.l.b16 %v264
        %v1193 = vunpack.c.l.b16 %v265
        %v1194 = vunpack.c.l.b16 %v266
        %v1195 = vunpack.c.l.b16 %v267
        %v1196 = vunpack.c.l.b16 %v268
        %v1197 = vpack.c.b16 %v1182, %v1181
        %v1198 = vpack.c.b16 %v1184, %v1183
        %v1199 = vpack.c.b16 %v1186, %v1185
        %v1200 = vpack.c.b16 %v1188, %v1187
        %v1201 = vpack.c.b16 %v1190, %v1189
        %v1202 = vpack.c.b16 %v1192, %v1191
        %v1203 = vpack.c.b16 %v1194, %v1193
        %v1204 = vpack.c.b16 %v1196, %v1195
        %v1205 = vunpack.c.l.b16 %v293
        %v1206 = vunpack.c.l.b16 %v303
        %v1207 = vunpack.c.l.b16 %v317
        %v1208 = vunpack.c.l.b16 %v327
        %v1209 = vunpack.c.l.b16 %v341
        %v1210 = vunpack.c.l.b16 %v351
        %v1211 = vunpack.c.l.b16 %v365
        %v1212 = vunpack.c.l.b16 %v375
        %v1213 = vunpack.c.l.b16 %v389
        %v1214 = vunpack.c.l.b16 %v399
        %v1215 = vunpack.c.l.b16 %v413
        %v1216 = vunpack.c.l.b16 %v423
        %v1217 = vunpack.c.l.b16 %v437
        %v1218 = vunpack.c.l.b16 %v447
        %v1219 = vunpack.c.l.b16 %v461
        %v1220 = vunpack.c.l.b16 %v471
        %v1221 = vpack.c.b16 %v1206, %v1205
        %v1222 = vpack.c.b16 %v1208, %v1207
        %v1223 = vpack.c.b16 %v1210, %v1209
        %v1224 = vpack.c.b16 %v1212, %v1211
        %v1225 = vpack.c.b16 %v1214, %v1213
        %v1226 = vpack.c.b16 %v1216, %v1215
        %v1227 = vpack.c.b16 %v1218, %v1217
        %v1228 = vpack.c.b16 %v1220, %v1219
        %1229 = vrot.lane.b32.xlu0 %v1221, 4
        %v1230 = vpop.permute.xlu0 %1229
        %1231 = vrot.lane.b32.xlu0 %v1222, 4
        %v1232 = vpop.permute.xlu0 %1231
        %1233 = vrot.lane.b32.xlu0 %v1223, 4
        %v1234 = vpop.permute.xlu0 %1233
        %1235 = vrot.lane.b32.xlu0 %v1224, 4
        %v1236 = vpop.permute.xlu0 %1235
        %1237 = vrot.lane.b32.xlu0 %v1225, 4
        %v1238 = vpop.permute.xlu0 %1237
        %1239 = vrot.lane.b32.xlu0 %v1226, 4
        %v1240 = vpop.permute.xlu0 %1239
        %1241 = vrot.lane.b32.xlu0 %v1227, 4
        %v1242 = vpop.permute.xlu0 %1241
        %1243 = vrot.lane.b32.xlu0 %v1228, 4
        %v1244 = vpop.permute.xlu0 %1243
        %v1245 = vunpack.c.l.b16 %v510
        %v1246 = vunpack.c.l.b16 %v513
        %v1247 = vunpack.c.l.b16 %v517
        %v1248 = vunpack.c.l.b16 %v520
        %v1249 = vunpack.c.l.b16 %v524
        %v1250 = vunpack.c.l.b16 %v527
        %v1251 = vunpack.c.l.b16 %v531
        %v1252 = vunpack.c.l.b16 %v534
        %v1253 = vunpack.c.l.b16 %v538
        %v1254 = vunpack.c.l.b16 %v541
        %v1255 = vunpack.c.l.b16 %v545
        %v1256 = vunpack.c.l.b16 %v548
        %v1257 = vunpack.c.l.b16 %v552
        %v1258 = vunpack.c.l.b16 %v555
        %v1259 = vunpack.c.l.b16 %v559
        %v1260 = vunpack.c.l.b16 %v562
        %v1261 = vpack.c.b16 %v1246, %v1245
        %v1262 = vpack.c.b16 %v1248, %v1247
        %v1263 = vpack.c.b16 %v1250, %v1249
        %v1264 = vpack.c.b16 %v1252, %v1251
        %v1265 = vpack.c.b16 %v1254, %v1253
        %v1266 = vpack.c.b16 %v1256, %v1255
        %v1267 = vpack.c.b16 %v1258, %v1257
        %v1268 = vpack.c.b16 %v1260, %v1259
        %1269 = vrot.lane.b32.xlu0 %v1261, 8
        %v1270 = vpop.permute.xlu0 %1269
        %1271 = vrot.lane.b32.xlu0 %v1262, 8
        %v1272 = vpop.permute.xlu0 %1271
        %1273 = vrot.lane.b32.xlu0 %v1263, 8
        %v1274 = vpop.permute.xlu0 %1273
        %1275 = vrot.lane.b32.xlu0 %v1264, 8
        %v1276 = vpop.permute.xlu0 %1275
        %1277 = vrot.lane.b32.xlu0 %v1265, 8
        %v1278 = vpop.permute.xlu0 %1277
        %1279 = vrot.lane.b32.xlu0 %v1266, 8
        %v1280 = vpop.permute.xlu0 %1279
        %1281 = vrot.lane.b32.xlu0 %v1267, 8
        %v1282 = vpop.permute.xlu0 %1281
        %1283 = vrot.lane.b32.xlu0 %v1268, 8
        %v1284 = vpop.permute.xlu0 %1283
        %v1293 = vunpack.c.l.b16 %v564
        %v1294 = vunpack.c.l.b16 %v565
        %v1295 = vunpack.c.l.b16 %v566
        %v1296 = vunpack.c.l.b16 %v567
        %v1297 = vunpack.c.l.b16 %v568
        %v1298 = vunpack.c.l.b16 %v569
        %v1299 = vunpack.c.l.b16 %v570
        %v1300 = vunpack.c.l.b16 %v571
        %v1301 = vunpack.c.l.b16 %v572
        %v1302 = vunpack.c.l.b16 %v573
        %v1303 = vunpack.c.l.b16 %v574
        %v1304 = vunpack.c.l.b16 %v575
        %v1305 = vunpack.c.l.b16 %v576
        %v1306 = vunpack.c.l.b16 %v577
        %v1307 = vunpack.c.l.b16 %v578
        %v1308 = vunpack.c.l.b16 %v579
        %v1309 = vpack.c.b16 %v1294, %v1293
        %v1310 = vpack.c.b16 %v1296, %v1295
        %v1311 = vpack.c.b16 %v1298, %v1297
        %v1312 = vpack.c.b16 %v1300, %v1299
        %v1313 = vpack.c.b16 %v1302, %v1301
        %v1314 = vpack.c.b16 %v1304, %v1303
        %v1315 = vpack.c.b16 %v1306, %v1305
        %v1316 = vpack.c.b16 %v1308, %v1307
        %1317 = vrot.lane.b32.xlu0 %v1309, 12
        %v1318 = vpop.permute.xlu0 %1317
        %1319 = vrot.lane.b32.xlu0 %v1310, 12
        %v1320 = vpop.permute.xlu0 %1319
        %1321 = vrot.lane.b32.xlu0 %v1311, 12
        %v1322 = vpop.permute.xlu0 %1321
        %1323 = vrot.lane.b32.xlu0 %v1312, 12
        %v1324 = vpop.permute.xlu0 %1323
        %1325 = vrot.lane.b32.xlu0 %v1313, 12
        %v1326 = vpop.permute.xlu0 %1325
        %1327 = vrot.lane.b32.xlu0 %v1314, 12
        %v1328 = vpop.permute.xlu0 %1327
        %1329 = vrot.lane.b32.xlu0 %v1315, 12
        %v1330 = vpop.permute.xlu0 %1329
        %1331 = vrot.lane.b32.xlu0 %v1316, 12
        %v1332 = vpop.permute.xlu0 %1331
        %v1333 = vunpack.c.l.b16 %v601
        %v1334 = vunpack.c.l.b16 %v611
        %v1335 = vunpack.c.l.b16 %v625
        %v1336 = vunpack.c.l.b16 %v635
        %v1337 = vunpack.c.l.b16 %v649
        %v1338 = vunpack.c.l.b16 %v659
        %v1339 = vunpack.c.l.b16 %v673
        %v1340 = vunpack.c.l.b16 %v683
        %v1341 = vunpack.c.l.b16 %v697
        %v1342 = vunpack.c.l.b16 %v707
        %v1343 = vunpack.c.l.b16 %v721
        %v1344 = vunpack.c.l.b16 %v731
        %v1345 = vunpack.c.l.b16 %v745
        %v1346 = vunpack.c.l.b16 %v755
        %v1347 = vunpack.c.l.b16 %v769
        %v1348 = vunpack.c.l.b16 %v779
        %v1349 = vpack.c.b16 %v1334, %v1333
        %v1350 = vpack.c.b16 %v1336, %v1335
        %v1351 = vpack.c.b16 %v1338, %v1337
        %v1352 = vpack.c.b16 %v1340, %v1339
        %v1353 = vpack.c.b16 %v1342, %v1341
        %v1354 = vpack.c.b16 %v1344, %v1343
        %v1355 = vpack.c.b16 %v1346, %v1345
        %v1356 = vpack.c.b16 %v1348, %v1347
        %1357 = vrot.lane.b32.xlu0 %v1349, 16
        %v1358 = vpop.permute.xlu0 %1357
        %1359 = vrot.lane.b32.xlu0 %v1350, 16
        %v1360 = vpop.permute.xlu0 %1359
        %1361 = vrot.lane.b32.xlu0 %v1351, 16
        %v1362 = vpop.permute.xlu0 %1361
        %1363 = vrot.lane.b32.xlu0 %v1352, 16
        %v1364 = vpop.permute.xlu0 %1363
        %1365 = vrot.lane.b32.xlu0 %v1353, 16
        %v1366 = vpop.permute.xlu0 %1365
        %1367 = vrot.lane.b32.xlu0 %v1354, 16
        %v1368 = vpop.permute.xlu0 %1367
        %1369 = vrot.lane.b32.xlu0 %v1355, 16
        %v1370 = vpop.permute.xlu0 %1369
        %1371 = vrot.lane.b32.xlu0 %v1356, 16
        %v1372 = vpop.permute.xlu0 %1371
        %v1373 = vunpack.c.l.b16 %v815
        %v1374 = vunpack.c.l.b16 %v818
        %v1375 = vunpack.c.l.b16 %v822
        %v1376 = vunpack.c.l.b16 %v825
        %v1377 = vunpack.c.l.b16 %v829
        %v1378 = vunpack.c.l.b16 %v832
        %v1379 = vunpack.c.l.b16 %v836
        %v1380 = vunpack.c.l.b16 %v839
        %v1381 = vunpack.c.l.b16 %v843
        %v1382 = vunpack.c.l.b16 %v846
        %v1383 = vunpack.c.l.b16 %v850
        %v1384 = vunpack.c.l.b16 %v853
        %v1385 = vunpack.c.l.b16 %v857
        %v1386 = vunpack.c.l.b16 %v860
        %v1387 = vunpack.c.l.b16 %v864
        %v1388 = vunpack.c.l.b16 %v867
        %v1389 = vpack.c.b16 %v1374, %v1373
        %v1390 = vpack.c.b16 %v1376, %v1375
        %v1391 = vpack.c.b16 %v1378, %v1377
        %v1392 = vpack.c.b16 %v1380, %v1379
        %v1393 = vpack.c.b16 %v1382, %v1381
        %v1394 = vpack.c.b16 %v1384, %v1383
        %v1395 = vpack.c.b16 %v1386, %v1385
        %v1396 = vpack.c.b16 %v1388, %v1387
        %1397 = vrot.lane.b32.xlu0 %v1389, 20
        %v1398 = vpop.permute.xlu0 %1397
        %1399 = vrot.lane.b32.xlu0 %v1390, 20
        %v1400 = vpop.permute.xlu0 %1399
        %1401 = vrot.lane.b32.xlu0 %v1391, 20
        %v1402 = vpop.permute.xlu0 %1401
        %1403 = vrot.lane.b32.xlu0 %v1392, 20
        %v1404 = vpop.permute.xlu0 %1403
        %1405 = vrot.lane.b32.xlu0 %v1393, 20
        %v1406 = vpop.permute.xlu0 %1405
        %1407 = vrot.lane.b32.xlu0 %v1394, 20
        %v1408 = vpop.permute.xlu0 %1407
        %1409 = vrot.lane.b32.xlu0 %v1395, 20
        %v1410 = vpop.permute.xlu0 %1409
        %1411 = vrot.lane.b32.xlu0 %v1396, 20
        %v1412 = vpop.permute.xlu0 %1411
        %v1421 = vunpack.c.l.b16 %v869
        %v1422 = vunpack.c.l.b16 %v870
        %v1423 = vunpack.c.l.b16 %v871
        %v1424 = vunpack.c.l.b16 %v872
        %v1425 = vunpack.c.l.b16 %v873
        %v1426 = vunpack.c.l.b16 %v874
        %v1427 = vunpack.c.l.b16 %v875
        %v1428 = vunpack.c.l.b16 %v876
        %v1429 = vunpack.c.l.b16 %v877
        %v1430 = vunpack.c.l.b16 %v878
        %v1431 = vunpack.c.l.b16 %v879
        %v1432 = vunpack.c.l.b16 %v880
        %v1433 = vunpack.c.l.b16 %v881
        %v1434 = vunpack.c.l.b16 %v882
        %v1435 = vunpack.c.l.b16 %v883
        %v1436 = vunpack.c.l.b16 %v884
        %v1437 = vpack.c.b16 %v1422, %v1421
        %v1438 = vpack.c.b16 %v1424, %v1423
        %v1439 = vpack.c.b16 %v1426, %v1425
        %v1440 = vpack.c.b16 %v1428, %v1427
        %v1441 = vpack.c.b16 %v1430, %v1429
        %v1442 = vpack.c.b16 %v1432, %v1431
        %v1443 = vpack.c.b16 %v1434, %v1433
        %v1444 = vpack.c.b16 %v1436, %v1435
        %1445 = vrot.lane.b32.xlu0 %v1437, 24
        %v1446 = vpop.permute.xlu0 %1445
        %1447 = vrot.lane.b32.xlu0 %v1438, 24
        %v1448 = vpop.permute.xlu0 %1447
        %1449 = vrot.lane.b32.xlu0 %v1439, 24
        %v1450 = vpop.permute.xlu0 %1449
        %1451 = vrot.lane.b32.xlu0 %v1440, 24
        %v1452 = vpop.permute.xlu0 %1451
        %1453 = vrot.lane.b32.xlu0 %v1441, 24
        %v1454 = vpop.permute.xlu0 %1453
        %1455 = vrot.lane.b32.xlu0 %v1442, 24
        %v1456 = vpop.permute.xlu0 %1455
        %1457 = vrot.lane.b32.xlu0 %v1443, 24
        %v1458 = vpop.permute.xlu0 %1457
        %1459 = vrot.lane.b32.xlu0 %v1444, 24
        %v1460 = vpop.permute.xlu0 %1459
        %v1461 = vunpack.c.l.b16 %v906
        %v1462 = vunpack.c.l.b16 %v916
        %v1463 = vunpack.c.l.b16 %v930
        %v1464 = vunpack.c.l.b16 %v940
        %v1465 = vunpack.c.l.b16 %v954
        %v1466 = vunpack.c.l.b16 %v964
        %v1467 = vunpack.c.l.b16 %v978
        %v1468 = vunpack.c.l.b16 %v988
        %v1469 = vunpack.c.l.b16 %v1002
        %v1470 = vunpack.c.l.b16 %v1012
        %v1471 = vunpack.c.l.b16 %v1026
        %v1472 = vunpack.c.l.b16 %v1036
        %v1473 = vunpack.c.l.b16 %v1050
        %v1474 = vunpack.c.l.b16 %v1060
        %v1475 = vunpack.c.l.b16 %v1074
        %v1476 = vunpack.c.l.b16 %v1084
        %v1477 = vpack.c.b16 %v1462, %v1461
        %v1478 = vpack.c.b16 %v1464, %v1463
        %v1479 = vpack.c.b16 %v1466, %v1465
        %v1480 = vpack.c.b16 %v1468, %v1467
        %v1481 = vpack.c.b16 %v1470, %v1469
        %v1482 = vpack.c.b16 %v1472, %v1471
        %v1483 = vpack.c.b16 %v1474, %v1473
        %v1484 = vpack.c.b16 %v1476, %v1475
        %1485 = vrot.lane.b32.xlu0 %v1477, 28
        %v1486 = vpop.permute.xlu0 %1485
        %1487 = vrot.lane.b32.xlu0 %v1478, 28
        %v1488 = vpop.permute.xlu0 %1487
        %1489 = vrot.lane.b32.xlu0 %v1479, 28
        %v1490 = vpop.permute.xlu0 %1489
        %1491 = vrot.lane.b32.xlu0 %v1480, 28
        %v1492 = vpop.permute.xlu0 %1491
        %1493 = vrot.lane.b32.xlu0 %v1481, 28
        %v1494 = vpop.permute.xlu0 %1493
        %1495 = vrot.lane.b32.xlu0 %v1482, 28
        %v1496 = vpop.permute.xlu0 %1495
        %1497 = vrot.lane.b32.xlu0 %v1483, 28
        %v1498 = vpop.permute.xlu0 %1497
        %1499 = vrot.lane.b32.xlu0 %v1484, 28
        %v1500 = vpop.permute.xlu0 %1499
        %v1501 = vunpack.c.l.b16 %v1120
        %v1502 = vunpack.c.l.b16 %v1123
        %v1503 = vunpack.c.l.b16 %v1127
        %v1504 = vunpack.c.l.b16 %v1130
        %v1505 = vunpack.c.l.b16 %v1134
        %v1506 = vunpack.c.l.b16 %v1137
        %v1507 = vunpack.c.l.b16 %v1141
        %v1508 = vunpack.c.l.b16 %v1144
        %v1509 = vunpack.c.l.b16 %v1148
        %v1510 = vunpack.c.l.b16 %v1151
        %v1511 = vunpack.c.l.b16 %v1155
        %v1512 = vunpack.c.l.b16 %v1158
        %v1513 = vunpack.c.l.b16 %v1162
        %v1514 = vunpack.c.l.b16 %v1165
        %v1515 = vunpack.c.l.b16 %v1169
        %v1516 = vunpack.c.l.b16 %v1172
        %v1517 = vpack.c.b16 %v1502, %v1501
        %v1518 = vpack.c.b16 %v1504, %v1503
        %v1519 = vpack.c.b16 %v1506, %v1505
        %v1520 = vpack.c.b16 %v1508, %v1507
        %v1521 = vpack.c.b16 %v1510, %v1509
        %v1522 = vpack.c.b16 %v1512, %v1511
        %v1523 = vpack.c.b16 %v1514, %v1513
        %v1524 = vpack.c.b16 %v1516, %v1515
        %1525 = vrot.lane.b32.xlu0 %v1517, 32
        %v1526 = vpop.permute.xlu0 %1525
        %1527 = vrot.lane.b32.xlu0 %v1518, 32
        %v1528 = vpop.permute.xlu0 %1527
        %1529 = vrot.lane.b32.xlu0 %v1519, 32
        %v1530 = vpop.permute.xlu0 %1529
        %1531 = vrot.lane.b32.xlu0 %v1520, 32
        %v1532 = vpop.permute.xlu0 %1531
        %1533 = vrot.lane.b32.xlu0 %v1521, 32
        %v1534 = vpop.permute.xlu0 %1533
        %1535 = vrot.lane.b32.xlu0 %v1522, 32
        %v1536 = vpop.permute.xlu0 %1535
        %1537 = vrot.lane.b32.xlu0 %v1523, 32
        %v1538 = vpop.permute.xlu0 %1537
        %1539 = vrot.lane.b32.xlu0 %v1524, 32
        %v1540 = vpop.permute.xlu0 %1539
        %vm1541 = vcmask 31744
        %v1544 = vsel %vm1541, %v1197, %v1230
        %v1547 = vsel %vm1541, %v1198, %v1232
        %v1550 = vsel %vm1541, %v1199, %v1234
        %v1553 = vsel %vm1541, %v1200, %v1236
        %v1556 = vsel %vm1541, %v1201, %v1238
        %v1559 = vsel %vm1541, %v1202, %v1240
        %v1562 = vsel %vm1541, %v1203, %v1242
        %v1565 = vsel %vm1541, %v1204, %v1244
        %vm1566 = vcmask 64512
        %v1568 = vsel %vm1566, %v1544, %v1270
        %v1570 = vsel %vm1566, %v1547, %v1272
        %v1572 = vsel %vm1566, %v1550, %v1274
        %v1574 = vsel %vm1566, %v1553, %v1276
        %v1576 = vsel %vm1566, %v1556, %v1278
        %v1578 = vsel %vm1566, %v1559, %v1280
        %v1580 = vsel %vm1566, %v1562, %v1282
        %v1582 = vsel %vm1566, %v1565, %v1284
        %vm1583 = vcmask 97280
        %v1585 = vsel %vm1583, %v1568, %v1318
        %v1587 = vsel %vm1583, %v1570, %v1320
        %v1589 = vsel %vm1583, %v1572, %v1322
        %v1591 = vsel %vm1583, %v1574, %v1324
        %v1593 = vsel %vm1583, %v1576, %v1326
        %v1595 = vsel %vm1583, %v1578, %v1328
        %v1597 = vsel %vm1583, %v1580, %v1330
        %v1599 = vsel %vm1583, %v1582, %v1332
        %vm1600 = vcmask 130048
        %v1602 = vsel %vm1600, %v1585, %v1358
        %v1604 = vsel %vm1600, %v1587, %v1360
        %v1606 = vsel %vm1600, %v1589, %v1362
        %v1608 = vsel %vm1600, %v1591, %v1364
        %v1610 = vsel %vm1600, %v1593, %v1366
        %v1612 = vsel %vm1600, %v1595, %v1368
        %v1614 = vsel %vm1600, %v1597, %v1370
        %v1616 = vsel %vm1600, %v1599, %v1372
        %vm1617 = vcmask 162816
        %v1619 = vsel %vm1617, %v1602, %v1398
        %v1621 = vsel %vm1617, %v1604, %v1400
        %v1623 = vsel %vm1617, %v1606, %v1402
        %v1625 = vsel %vm1617, %v1608, %v1404
        %v1627 = vsel %vm1617, %v1610, %v1406
        %v1629 = vsel %vm1617, %v1612, %v1408
        %v1631 = vsel %vm1617, %v1614, %v1410
        %v1633 = vsel %vm1617, %v1616, %v1412
        %vm1634 = vcmask 195584
        %v1636 = vsel %vm1634, %v1619, %v1446
        %v1638 = vsel %vm1634, %v1621, %v1448
        %v1640 = vsel %vm1634, %v1623, %v1450
        %v1642 = vsel %vm1634, %v1625, %v1452
        %v1644 = vsel %vm1634, %v1627, %v1454
        %v1646 = vsel %vm1634, %v1629, %v1456
        %v1648 = vsel %vm1634, %v1631, %v1458
        %v1650 = vsel %vm1634, %v1633, %v1460
        %vm1651 = vcmask 228352
        %v1653 = vsel %vm1651, %v1636, %v1486
        %v1655 = vsel %vm1651, %v1638, %v1488
        %v1657 = vsel %vm1651, %v1640, %v1490
        %v1659 = vsel %vm1651, %v1642, %v1492
        %v1661 = vsel %vm1651, %v1644, %v1494
        %v1663 = vsel %vm1651, %v1646, %v1496
        %v1665 = vsel %vm1651, %v1648, %v1498
        %v1667 = vsel %vm1651, %v1650, %v1500
        %vm1668 = vcmask 261120
        %v1670 = vsel %vm1668, %v1653, %v1526
        %v1672 = vsel %vm1668, %v1655, %v1528
        %v1674 = vsel %vm1668, %v1657, %v1530
        %v1676 = vsel %vm1668, %v1659, %v1532
        %v1678 = vsel %vm1668, %v1661, %v1534
        %v1680 = vsel %vm1668, %v1663, %v1536
        %v1682 = vsel %vm1668, %v1665, %v1538
        %v1684 = vsel %vm1668, %v1667, %v1540
        %v1685 = vld [vmem:[%s1] sm:$0xf]
        %v1686 = vld [vmem:[%s1 + $0x4] sm:$0xf]
        %v1687 = vld [vmem:[%s1 + $0x8] sm:$0xf]
        %v1688 = vld [vmem:[%s1 + $0xc] sm:$0xf]
        %v1689 = vld [vmem:[%s1 + $0x10] sm:$0x3]
        %v1690 = vld [vmem:[%s3] sm:$0x1]
        %v1692 = vlaneseq
        %v1693 = vshrl.u32 %v1692, 7
        %v1694 = vsub.s32 0, %v1693
        %v1695 = vrot.slane %v1690, %v1694
        %v1702 = vunpack.c.l.b16 %v1685
        %v1703 = vunpack.c.l.b16 %v1686
        %v1704 = vunpack.c.l.b16 %v1687
        %v1705 = vunpack.c.l.b16 %v1688
        %v1706 = vunpack.c.l.b16 %v1689
        %v1707 = vpack.c.b16 %v1703, %v1702
        %v1708 = vpack.c.b16 %v1705, %v1704
        %v1709 = vpack.c.b16 %v1706, %v1706
        %vm1712 = vcmask 293888
        %v1713 = vsel %vm1712, %v1670, 0
        %v1715 = vsel %vm1712, %v1672, 0
        %v1717 = vsel %vm1712, %v1674, 0
        %v1719 = vsel %vm1712, %v1676, 0
        %v1721 = vsel %vm1712, %v1678, 0
        %v1723 = vsel %vm1712, %v1680, 0
        %v1725 = vsel %vm1712, %v1682, 0
        %v1727 = vsel %vm1712, %v1684, 0
        %vm1729 = vcmask 1041408
        %v1731 = vsel %vm1729, %v1709, 0
        %1733 = vmatprep.subr.bf16.mxu0 0
        %1734 = vmatpush1.bf16.msra.mxu0 %v1707
        %1735 = vmatprep.subr.bf16.mxu0 0
        %1736 = vmatpush1.bf16.msra.mxu0 %v1708
        %1737 = vmatprep.subr.bf16.mxu0 0
        %1738 = vmatpush1.bf16.msra.mxu0 %v1731
        %1739 = vmatprep.subr.bf16.mxu0 0
        %1740 = vmatpush1.bf16.msra.mxu0 0
        %1741 = vmatprep.subr.bf16.mxu0 0
        %1742 = vmatpush1.bf16.msra.mxu0 0
        %1743 = vmatprep.subr.bf16.mxu0 0
        %1744 = vmatpush1.bf16.msra.mxu0 0
        %1745 = vmatprep.subr.bf16.mxu0 0
        %1746 = vmatpush1.bf16.msra.mxu0 0
        %1747 = vmatprep.subr.bf16.mxu0 0
        %1748 = vmatpush1.bf16.msra.mxu0 0
        %1749 = vmatprep.subr.bf16.mxu0 0
        %1750 = vmatpush1.bf16.msra.mxu0 0
        %1751 = vmatprep.subr.bf16.mxu0 0
        %1752 = vmatpush1.bf16.msra.mxu0 0
        %1753 = vmatprep.subr.bf16.mxu0 0
        %1754 = vmatpush1.bf16.msra.mxu0 0
        %1755 = vmatprep.subr.bf16.mxu0 0
        %1756 = vmatpush1.bf16.msra.mxu0 0
        %1757 = vmatprep.subr.bf16.mxu0 0
        %1758 = vmatpush1.bf16.msra.mxu0 0
        %1759 = vmatprep.subr.bf16.mxu0 0
        %1760 = vmatpush1.bf16.msra.mxu0 0
        %1761 = vmatprep.subr.bf16.mxu0 0
        %1762 = vmatpush1.bf16.msra.mxu0 0
        %1763 = vmatprep.subr.bf16.mxu0 0
        %1764 = vmatpush1.bf16.msra.mxu0 0
        %1765 = vmatprep.mubr.bf16.mxu0 0
        %1766 = vmatmul.mubr.bf16.gmra.mrb[0].mxu0 %v1713
        %v1767 = vpop.f32.mrb[0].mxu0
        %v1768 = vadd.f32 %v1695, %v1767
        %v1769 = vpop.f32.mrb[0].mxu0
        %v1770 = vpop.f32.mrb[0].mxu0
        %v1771 = vadd.f32 %v1695, %v1770
        %v1772 = vpop.f32.mrb[0].mxu0
        %1773 = vmatprep.mubr.bf16.mxu0 0
        %1774 = vmatmul.mubr.bf16.gmra.mrb[0].mxu0 %v1715
        %v1775 = vpop.f32.mrb[0].mxu0
        %v1776 = vadd.f32 %v1695, %v1775
        %v1777 = vpop.f32.mrb[0].mxu0
        %v1778 = vpop.f32.mrb[0].mxu0
        %v1779 = vadd.f32 %v1695, %v1778
        %v1780 = vpop.f32.mrb[0].mxu0
        %1781 = vmatprep.mubr.bf16.mxu0 0
        %1782 = vmatmul.mubr.bf16.gmra.mrb[0].mxu0 %v1717
        %v1783 = vpop.f32.mrb[0].mxu0
        %v1784 = vadd.f32 %v1695, %v1783
        %v1785 = vpop.f32.mrb[0].mxu0
        %v1786 = vpop.f32.mrb[0].mxu0
        %v1787 = vadd.f32 %v1695, %v1786
        %v1788 = vpop.f32.mrb[0].mxu0
        %1789 = vmatprep.mubr.bf16.mxu0 0
        %1790 = vmatmul.mubr.bf16.gmra.mrb[0].mxu0 %v1719
        %v1791 = vpop.f32.mrb[0].mxu0
        %v1792 = vadd.f32 %v1695, %v1791
        %v1793 = vpop.f32.mrb[0].mxu0
        %v1794 = vpop.f32.mrb[0].mxu0
        %v1795 = vadd.f32 %v1695, %v1794
        %v1796 = vpop.f32.mrb[0].mxu0
        %1797 = vmatprep.mubr.bf16.mxu0 0
        %1798 = vmatmul.mubr.bf16.gmra.mrb[0].mxu0 %v1721
        %v1799 = vpop.f32.mrb[0].mxu0
        %v1800 = vadd.f32 %v1695, %v1799
        %v1801 = vpop.f32.mrb[0].mxu0
        %v1802 = vpop.f32.mrb[0].mxu0
        %v1803 = vadd.f32 %v1695, %v1802
        %v1804 = vpop.f32.mrb[0].mxu0
        %1805 = vmatprep.mubr.bf16.mxu0 0
        %1806 = vmatmul.mubr.bf16.gmra.mrb[0].mxu0 %v1723
        %v1807 = vpop.f32.mrb[0].mxu0
        %v1808 = vadd.f32 %v1695, %v1807
        %v1809 = vpop.f32.mrb[0].mxu0
        %v1810 = vpop.f32.mrb[0].mxu0
        %v1811 = vadd.f32 %v1695, %v1810
        %v1812 = vpop.f32.mrb[0].mxu0
        %1813 = vmatprep.mubr.bf16.mxu0 0
        %1814 = vmatmul.mubr.bf16.gmra.mrb[0].mxu0 %v1725
        %v1815 = vpop.f32.mrb[0].mxu0
        %v1816 = vadd.f32 %v1695, %v1815
        %v1817 = vpop.f32.mrb[0].mxu0
        %v1818 = vpop.f32.mrb[0].mxu0
        %v1819 = vadd.f32 %v1695, %v1818
        %v1820 = vpop.f32.mrb[0].mxu0
        %1821 = vmatprep.mubr.bf16.mxu0 0
        %1822 = vmatmul.mubr.bf16.gmra.mrb[0].mxu0 %v1727
        %v1823 = vpop.f32.mrb[0].mxu0
        %v1824 = vadd.f32 %v1695, %v1823
        %v1825 = vpop.f32.mrb[0].mxu0
        %v1826 = vpop.f32.mrb[0].mxu0
        %v1827 = vadd.f32 %v1695, %v1826
        %v1828 = vpop.f32.mrb[0].mxu0
        %1829 = vdwg.mxu0
        %v1830 = vmax.f32 %v1768, 0.0
        %v1831 = vmax.f32 %v1771, 0.0
        %v1832 = vmax.f32 %v1776, 0.0
        %v1833 = vmax.f32 %v1779, 0.0
        %v1834 = vmax.f32 %v1784, 0.0
        %v1835 = vmax.f32 %v1787, 0.0
        %v1836 = vmax.f32 %v1792, 0.0
        %v1837 = vmax.f32 %v1795, 0.0
        %v1838 = vmax.f32 %v1800, 0.0
        %v1839 = vmax.f32 %v1803, 0.0
        %v1840 = vmax.f32 %v1808, 0.0
        %v1841 = vmax.f32 %v1811, 0.0
        %v1842 = vmax.f32 %v1816, 0.0
        %v1843 = vmax.f32 %v1819, 0.0
        %v1844 = vmax.f32 %v1824, 0.0
        %v1845 = vmax.f32 %v1827, 0.0
        %v1846 = vld [vmem:[%s2] sm:$0x3]
        %v1848 = vsel %vm1541, %v1349, 0
        %v1851 = vsel %vm1541, %v1350, 0
        %v1854 = vsel %vm1541, %v1351, 0
        %v1857 = vsel %vm1541, %v1352, 0
        %v1860 = vsel %vm1541, %v1353, 0
        %v1863 = vsel %vm1541, %v1354, 0
        %v1866 = vsel %vm1541, %v1355, 0
        %v1869 = vsel %vm1541, %v1356, 0
        %v1872 = vsel %vm1729, %v1846, 0
        %1874 = vmatprep.subr.bf16.mxu0 0
        %1875 = vmatpush1.bf16.msra.mxu0 %v1872
        %1876 = vmatprep.subr.bf16.mxu0 0
        %1877 = vmatpush1.bf16.msra.mxu0 0
        %1878 = vmatprep.subr.bf16.mxu0 0
        %1879 = vmatpush1.bf16.msra.mxu0 0
        %1880 = vmatprep.subr.bf16.mxu0 0
        %1881 = vmatpush1.bf16.msra.mxu0 0
        %1882 = vmatprep.subr.bf16.mxu0 0
        %1883 = vmatpush1.bf16.msra.mxu0 0
        %1884 = vmatprep.subr.bf16.mxu0 0
        %1885 = vmatpush1.bf16.msra.mxu0 0
        %1886 = vmatprep.subr.bf16.mxu0 0
        %1887 = vmatpush1.bf16.msra.mxu0 0
        %1888 = vmatprep.subr.bf16.mxu0 0
        %1889 = vmatpush1.bf16.msra.mxu0 0
        %1890 = vmatprep.subr.bf16.mxu0 0
        %1891 = vmatpush1.bf16.msra.mxu0 0
        %1892 = vmatprep.subr.bf16.mxu0 0
        %1893 = vmatpush1.bf16.msra.mxu0 0
        %1894 = vmatprep.subr.bf16.mxu0 0
        %1895 = vmatpush1.bf16.msra.mxu0 0
        %1896 = vmatprep.subr.bf16.mxu0 0
        %1897 = vmatpush1.bf16.msra.mxu0 0
        %1898 = vmatprep.subr.bf16.mxu0 0
        %1899 = vmatpush1.bf16.msra.mxu0 0
        %1900 = vmatprep.subr.bf16.mxu0 0
        %1901 = vmatpush1.bf16.msra.mxu0 0
        %1902 = vmatprep.subr.bf16.mxu0 0
        %1903 = vmatpush1.bf16.msra.mxu0 0
        %1904 = vmatprep.subr.bf16.mxu0 0
        %1905 = vmatpush1.bf16.msra.mxu0 0
        %1906 = vmatprep.mubr.bf16.mxu0 0
        %1907 = vmatmul.mubr.bf16.gmra.mrb[0].mxu0 %v1848
        %v1908 = vpop.f32.mrb[0].mxu0
        %v1909 = vadd.f32 0.0, %v1908
        %v1910 = vpop.f32.mrb[0].mxu0
        %v1911 = vpop.f32.mrb[0].mxu0
        %v1912 = vadd.f32 0.0, %v1911
        %v1913 = vpop.f32.mrb[0].mxu0
        %1914 = vmatprep.mubr.bf16.mxu0 0
        %1915 = vmatmul.mubr.bf16.gmra.mrb[0].mxu0 %v1851
        %v1916 = vpop.f32.mrb[0].mxu0
        %v1917 = vadd.f32 0.0, %v1916
        %v1918 = vpop.f32.mrb[0].mxu0
        %v1919 = vpop.f32.mrb[0].mxu0
        %v1920 = vadd.f32 0.0, %v1919
        %v1921 = vpop.f32.mrb[0].mxu0
        %1922 = vmatprep.mubr.bf16.mxu0 0
        %1923 = vmatmul.mubr.bf16.gmra.mrb[0].mxu0 %v1854
        %v1924 = vpop.f32.mrb[0].mxu0
        %v1925 = vadd.f32 0.0, %v1924
        %v1926 = vpop.f32.mrb[0].mxu0
        %v1927 = vpop.f32.mrb[0].mxu0
        %v1928 = vadd.f32 0.0, %v1927
        %v1929 = vpop.f32.mrb[0].mxu0
        %1930 = vmatprep.mubr.bf16.mxu0 0
        %1931 = vmatmul.mubr.bf16.gmra.mrb[0].mxu0 %v1857
        %v1932 = vpop.f32.mrb[0].mxu0
        %v1933 = vadd.f32 0.0, %v1932
        %v1934 = vpop.f32.mrb[0].mxu0
        %v1935 = vpop.f32.mrb[0].mxu0
        %v1936 = vadd.f32 0.0, %v1935
        %v1937 = vpop.f32.mrb[0].mxu0
        %1938 = vmatprep.mubr.bf16.mxu0 0
        %1939 = vmatmul.mubr.bf16.gmra.mrb[0].mxu0 %v1860
        %v1940 = vpop.f32.mrb[0].mxu0
        %v1941 = vadd.f32 0.0, %v1940
        %v1942 = vpop.f32.mrb[0].mxu0
        %v1943 = vpop.f32.mrb[0].mxu0
        %v1944 = vadd.f32 0.0, %v1943
        %v1945 = vpop.f32.mrb[0].mxu0
        %1946 = vmatprep.mubr.bf16.mxu0 0
        %1947 = vmatmul.mubr.bf16.gmra.mrb[0].mxu0 %v1863
        %v1948 = vpop.f32.mrb[0].mxu0
        %v1949 = vadd.f32 0.0, %v1948
        %v1950 = vpop.f32.mrb[0].mxu0
        %v1951 = vpop.f32.mrb[0].mxu0
        %v1952 = vadd.f32 0.0, %v1951
        %v1953 = vpop.f32.mrb[0].mxu0
        %1954 = vmatprep.mubr.bf16.mxu0 0
        %1955 = vmatmul.mubr.bf16.gmra.mrb[0].mxu0 %v1866
        %v1956 = vpop.f32.mrb[0].mxu0
        %v1957 = vadd.f32 0.0, %v1956
        %v1958 = vpop.f32.mrb[0].mxu0
        %v1959 = vpop.f32.mrb[0].mxu0
        %v1960 = vadd.f32 0.0, %v1959
        %v1961 = vpop.f32.mrb[0].mxu0
        %1962 = vmatprep.mubr.bf16.mxu0 0
        %1963 = vmatmul.mubr.bf16.gmra.mrb[0].mxu0 %v1869
        %v1964 = vpop.f32.mrb[0].mxu0
        %v1965 = vadd.f32 0.0, %v1964
        %v1966 = vpop.f32.mrb[0].mxu0
        %v1967 = vpop.f32.mrb[0].mxu0
        %v1968 = vadd.f32 0.0, %v1967
        %v1969 = vpop.f32.mrb[0].mxu0
        %1970 = vdwg.mxu0
        %v1971 = vadd.f32 %v1830, %v1909
        %v1972 = vadd.f32 %v1831, %v1912
        %v1973 = vadd.f32 %v1832, %v1917
        %v1974 = vadd.f32 %v1833, %v1920
        %v1975 = vadd.f32 %v1834, %v1925
        %v1976 = vadd.f32 %v1835, %v1928
        %v1977 = vadd.f32 %v1836, %v1933
        %v1978 = vadd.f32 %v1837, %v1936
        %v1979 = vadd.f32 %v1838, %v1941
        %v1980 = vadd.f32 %v1839, %v1944
        %v1981 = vadd.f32 %v1840, %v1949
        %v1982 = vadd.f32 %v1841, %v1952
        %v1983 = vadd.f32 %v1842, %v1957
        %v1984 = vadd.f32 %v1843, %v1960
        %v1985 = vadd.f32 %v1844, %v1965
        %v1986 = vadd.f32 %v1845, %v1968
        %v1987 = vld [vmem:[%s4] sm:$0x1]
        %v1989 = vlaneseq
        %v1990 = vshrl.u32 %v1989, 7
        %v1991 = vsub.s32 0, %v1990
        %v1992 = vrot.slane %v1987, %v1991
        %v1994 = vadd.f32 %v1971, %v1992
        %v1995 = vadd.f32 %v1972, %v1992
        %v1996 = vadd.f32 %v1973, %v1992
        %v1997 = vadd.f32 %v1974, %v1992
        %v1998 = vadd.f32 %v1975, %v1992
        %v1999 = vadd.f32 %v1976, %v1992
        %v2000 = vadd.f32 %v1977, %v1992
        %v2001 = vadd.f32 %v1978, %v1992
        %v2002 = vadd.f32 %v1979, %v1992
        %v2003 = vadd.f32 %v1980, %v1992
        %v2004 = vadd.f32 %v1981, %v1992
        %v2005 = vadd.f32 %v1982, %v1992
        %v2006 = vadd.f32 %v1983, %v1992
        %v2007 = vadd.f32 %v1984, %v1992
        %v2008 = vadd.f32 %v1985, %v1992
        %v2009 = vadd.f32 %v1986, %v1992
        %2010 = vst [vmem:[%s241] sm:$0xff] %v1994
        %2011 = vst [vmem:[%s241 + $0x8] sm:$0xff] %v1995
        %2012 = vst [vmem:[%s241 + $0x10] sm:$0xff] %v1996
        %2013 = vst [vmem:[%s241 + $0x18] sm:$0xff] %v1997
        %2014 = vst [vmem:[%s241 + $0x20] sm:$0xff] %v1998
        %2015 = vst [vmem:[%s241 + $0x28] sm:$0xff] %v1999
        %2016 = vst [vmem:[%s241 + $0x30] sm:$0xff] %v2000
        %2017 = vst [vmem:[%s241 + $0x38] sm:$0xff] %v2001
        %2018 = vst [vmem:[%s241 + $0x40] sm:$0xff] %v2002
        %2019 = vst [vmem:[%s241 + $0x48] sm:$0xff] %v2003
        %2020 = vst [vmem:[%s241 + $0x50] sm:$0xff] %v2004
        %2021 = vst [vmem:[%s241 + $0x58] sm:$0xff] %v2005
        %2022 = vst [vmem:[%s241 + $0x60] sm:$0xff] %v2006
        %2023 = vst [vmem:[%s241 + $0x68] sm:$0xff] %v2007
        %2024 = vst [vmem:[%s241 + $0x70] sm:$0xff] %v2008
        %2025 = vst [vmem:[%s241 + $0x78] sm:$0xff] %v2009
        %s2026 = sand.u32 %s155, 1
        %s2027 = scalar_lea.sflag [#allocation3], %s2026
        %s2028 = sand.u32 %s155, 1
        %s2029 = smul.addr %s2028, 128
        %s2030 = scalar_lea.vmem [#allocation2], %s2029
        // Predicated region
        $region41: #{tpu_custom_call.1} parent=39 // pred_check
          %p2031 = pneg %p165
        $region42: #{tpu_custom_call.1} parent=39 // pred_check_branch
          %2033 = sbr.rel (%p2031) target = $region44
        $region43: #{tpu_custom_call.1} parent=39 // pred_region
          %s2034 = smul.u32 8, %s24
          %s2036 = ssub.s32 2048, 2048
          %2037 = vsyncadd %s2027, %s2036
          %s2038 = smul.addr %s2034, 2
          %s2039 = smul.addr %s23, 32
          %s2040 = sadd.s32 %s2038, %s2039
          %s2041 = smul.addr %s2040, 128
          %s2042 = scalar_lea.hbm %s5, %s2041
          %s2043 = sshll.u32 %s2030, 4
          %s2044 = int_to_ptr.vmem [resolvable:$true] %s2043
          %2049 = dma.vmem_to_hbm [thread:$0]  %s2044, 2048, %s2042, %s2027, 128, 128, 8
        $region44: #{tpu_custom_call.1} parent=39 // pred_fallthru
          _
      $region40: #{tpu_custom_call.1} parent=5 // pred_fallthru
        _
      %p2050 = scmp.le.s32.totalorder 2, %s14
      // Predicated region
      $region45: #{tpu_custom_call.1} parent=5 // pred_check
        %p2051 = pneg %p2050
      $region46: #{tpu_custom_call.1} parent=5 // pred_check_branch
        %2053 = sbr.rel (%p2051) target = $region48
      $region47: #{tpu_custom_call.1} parent=5 // pred_region
        %s2054 = ssub.s32 %s14, 2
        // Predicated region
        $region49: #{tpu_custom_call.1} parent=47 // pred_check
          %p2055 = pneg %p171
        $region50: #{tpu_custom_call.1} parent=47 // pred_check_branch
          %2057 = sbr.rel (%p2055) target = $region52
        $region51: #{tpu_custom_call.1} parent=47 // pred_region
          %s2058 = sand.u32 %s156, 1
          %s2059 = scalar_lea.sflag [#allocation3], %s2058
          %s2060 = sand.u32 %s156, 1
          %s2061 = smul.addr %s2060, 128
          %s2062 = scalar_lea.vmem [#allocation2], %s2061
          %2063 = dma.done %s2059, 2048
        $region52: #{tpu_custom_call.1} parent=47 // pred_fallthru
          _
      $region48: #{tpu_custom_call.1} parent=5 // pred_fallthru
        _
    $region6: #{tpu_custom_call.1} parent=1 // loop_footer
      %s18 = sadd.s32 1, %s14
    $region7: #{tpu_custom_call.1} parent=1 // loop_footer_branch
      %13 = sbr.rel target = $region3
    $region8: #{tpu_custom_call.1} parent=1 // loop_exit
      _
    %2064 = vsyncpa [#allocation3], 1
    %s2065 = scalar_lea.sflag [#allocation3], 1
    %2066 = vsyncpa %s2065, 1

</llo_original>
